<compile_context>
chip_gen: v6e
topology: v6e:2x2x1
jax: 0.10.0
libtpu: 0.0.40
codegen_flags: <defaults>
</compile_context>

<pallas_src>
import math
from functools import partial

import jax
import jax.numpy as jnp
from jax.experimental import pallas as pl
from jax.experimental.pallas import tpu as pltpu


def autopad(k, p=None, d=1):
    """Pad to 'same' shape outputs (mirrors the PyTorch helper)."""
    if d > 1:
        k = d * (k - 1) + 1 if isinstance(k, int) else [d * (x - 1) + 1 for x in k]
    if p is None:
        p = k // 2 if isinstance(k, int) else [x // 2 for x in k]
    return p


def _round_up(x, m):
    return (x + m - 1) // m * m


def _vmem_budget_bytes():
    """~3/4 of per-core VMEM capacity (96 MiB on v5e/v6e, 48 MiB on v7x)."""
    try:
        cap = int(pltpu.get_tpu_info().vmem_capacity_bytes)
    except Exception:
        cap = 64 << 20                    # conservative default (v7x per-TC)
    return (cap * 3) // 4


def _pick_tile_r(r, k_dim, c_pad, budget):
    """Largest row tile whose double-buffered pipeline footprint fits VMEM."""
    def step_bytes(tr):
        b = 2 * tr * k_dim * 2            # patches tile, bf16, double buffered
        b += 2 * tr * c_pad * 4           # y / out tile, f32, double buffered
        b += 2 * k_dim * c_pad * 2        # weights (constant index; budget 2 bufs)
        b += 16 * c_pad * 4               # stats / affine vectors, slack
        return b

    for tr in (1024, 768, 512, 256):
        if tr <= r and step_bytes(tr) <= budget // 2:
            return tr
    if r >= 256:
        return 256                        # TODO(synk): K-tiling if weights alone
                                          # exceed the budget at 256 rows.
    return max(16, _round_up(r, 16))      # bf16 sublane packing is 16 rows


# ---------------------------------------------------------------------------
# Kernels
# ---------------------------------------------------------------------------

def _fused_convbn_kernel(p_ref, w_ref, g_ref, b_ref, o_ref,
                         y_sc, m_sc, v_sc, a_sc,
                         *, rows, rows_padded, tile_r, eps, slope):
    """3-phase fused conv-matmul + BatchNorm(batch stats) + LeakyReLU.

    grid = (3, r_tiles); the f32 conv output stays resident in y_sc (VMEM).
    """
    ph = pl.program_id(0)
    j = pl.program_id(1)
    row0 = pl.multiple_of(j * tile_r, tile_r)

    # ---- phase 0: conv-as-matmul tile + per-channel sum --------------------
    @pl.when(ph == 0)
    def _():
        @pl.when(j == 0)
        def _():
            m_sc[...] = jnp.zeros_like(m_sc)
            v_sc[...] = jnp.zeros_like(v_sc)
        y = jnp.dot(p_ref[...], w_ref[...], preferred_element_type=jnp.float32)
        y_sc[pl.ds(row0, tile_r), :] = y
        m_sc[...] += jnp.sum(y, axis=0, keepdims=True)

    # ---- phase 1: exact centered variance accumulation ---------------------
    @pl.when(ph == 1)
    def _():
        @pl.when(j == 0)
        def _():
            m_sc[...] = m_sc[...] * (1.0 / rows)           # sum -> mean
        yc = y_sc[pl.ds(row0, tile_r), :] - m_sc[...]
        if rows_padded != rows:                            # mask zero-pad rows
            ridx = jax.lax.broadcasted_iota(jnp.int32, (tile_r, 1), 0) + row0
            yc = jnp.where(ridx < rows, yc, 0.0)
        v_sc[...] += jnp.sum(yc * yc, axis=0, keepdims=True)

    # ---- phase 2: folded BN affine + LeakyReLU ------------------------------
    @pl.when(ph == 2)
    def _():
        @pl.when(j == 0)
        def _():
            var = v_sc[...] * (1.0 / rows)                 # biased batch var
            scale = g_ref[...] * jax.lax.rsqrt(var + eps)
            a_sc[0:1, :] = scale
            a_sc[1:2, :] = b_ref[...] - m_sc[...] * scale
        z = y_sc[pl.ds(row0, tile_r), :] * a_sc[0:1, :] + a_sc[1:2, :]
        o_ref[...] = jnp.where(z >= 0, z, slope * z).astype(o_ref.dtype)


def _matmul_stats_kernel(p_ref, w_ref, y_ref, s_ref, q_ref):
    """Fallback kernel 1: matmul tile + per-tile sum / sum-of-squares."""
    y = jnp.dot(p_ref[...], w_ref[...], preferred_element_type=jnp.float32)
    y_ref[...] = y
    s_ref[...] = jnp.sum(y, axis=0, keepdims=True)
    q_ref[...] = jnp.sum(y * y, axis=0, keepdims=True)


def _bn_act_kernel(y_ref, scale_ref, shift_ref, o_ref, *, slope):
    """Fallback kernel 2: per-channel affine + LeakyReLU (in place over y)."""
    z = y_ref[...] * scale_ref[...] + shift_ref[...]
    o_ref[...] = jnp.where(z >= 0, z, slope * z).astype(o_ref.dtype)


# ---------------------------------------------------------------------------
# im2col (JAX glue, bf16) — only used for k > 1
# ---------------------------------------------------------------------------

def _im2col_bf16(x_nhwc, kh, kw, stride, pad, dilation):
    """x: (N, H, W, C) bf16 -> patches (N, Ho*Wo, kh*kw*C), Ho, Wo."""
    n, h, w, c = x_nhwc.shape
    if kh == 1 and kw == 1 and stride == 1 and pad == 0:
        return x_nhwc.reshape(n, h * w, c), h, w           # pointwise: no inflation
    xp = jnp.pad(x_nhwc, ((0, 0), (pad, pad), (pad, pad), (0, 0)))
    hp, wp = xp.shape[1], xp.shape[2]
    ho = (hp - dilation * (kh - 1) - 1) // stride + 1
    wo = (wp - dilation * (kw - 1) - 1) // stride + 1
    cols = []
    for di in range(kh):
        for dj in range(kw):
            r0, c0 = di * dilation, dj * dilation
            cols.append(xp[:, r0:r0 + stride * ho:stride,
                           c0:c0 + stride * wo:stride, :])
    patches = jnp.stack(cols, axis=3)                       # (N, Ho, Wo, kh*kw, C)
    # TODO(synk): replace with in-kernel implicit GEMM (halo DMA) to avoid the
    # kh*kw activation inflation in HBM.
    return patches.reshape(n, ho * wo, kh * kw * c), ho, wo


# ---------------------------------------------------------------------------
# Forward wrapper
# ---------------------------------------------------------------------------

def convx_forward(x_nchw, w_oihw, gamma, beta, *, stride=1, padding=None,
                  dilation=1, groups=1, eps=1e-5, negative_slope=0.01):
    assert groups == 1, "grouped conv not implemented"  # TODO(synk): groups > 1
    cout, cin, kh, kw = w_oihw.shape
    if padding is None:
        padding = autopad(kh, None, dilation)

    # NCHW -> NHWC, bf16 activations/weights for the MXU; accumulate in f32.
    x = jnp.transpose(x_nchw, (0, 2, 3, 1)).astype(jnp.bfloat16)
    n = x.shape[0]
    patches, ho, wo = _im2col_bf16(x, kh, kw, stride, padding, dilation)
    r = n * ho * wo
    k_dim = kh * kw * cin
    patches = patches.reshape(r, k_dim)

    # Lane-dense output channels; the contraction dim keeps its natural size
    # (full-dim blocks are legal), so there is no K-pad HBM copy.
    c_pad = _round_up(cout, 128)

    budget = _vmem_budget_bytes()
    tile_r = _pick_tile_r(r, k_dim, c_pad, budget)
    r_pad = _round_up(r, tile_r)

    # Fused single-call path when the f32 conv output fits comfortably in VMEM.
    fused = 3 * (r_pad * c_pad * 4) <= budget
    if not fused and r >= 512 and r_pad // tile_r < 2:
        # Keep >= 2 grid steps so both v7x TensorCores get work on the
        # "parallel" row axis of the fallback path.
        tile_r = max(256, _round_up((r + 1) // 2, 256))
        r_pad = _round_up(r, tile_r)
    r_tiles = r_pad // tile_r

    if r_pad != r:
        patches = jnp.pad(patches, ((0, r_pad - r), (0, 0)))

    w2d = jnp.transpose(w_oihw, (2, 3, 1, 0)).reshape(k_dim, cout)
    w2d = w2d.astype(jnp.bfloat16)
    if c_pad != cout:
        w2d = jnp.pad(w2d, ((0, 0), (0, c_pad - cout)))
    gamma2d = jnp.pad(gamma.astype(jnp.float32).reshape(1, cout),
                      ((0, 0), (0, c_pad - cout)))
    beta2d = jnp.pad(beta.astype(jnp.float32).reshape(1, cout),
                     ((0, 0), (0, c_pad - cout)))

    if fused:
        out = pl.pallas_call(
            partial(_fused_convbn_kernel, rows=r, rows_padded=r_pad,
                    tile_r=tile_r, eps=eps, slope=negative_slope),
            out_shape=jax.ShapeDtypeStruct((r_pad, c_pad), jnp.float32),
            grid=(3, r_tiles),
            in_specs=[
                # patches: only streamed during phase 0 (constant block after)
                pl.BlockSpec((tile_r, k_dim),
                             lambda ph, j: (j * (1 - jnp.minimum(ph, 1)), 0)),
                # weights / gamma / beta: constant index -> fetched once
                pl.BlockSpec((k_dim, c_pad), lambda ph, j: (0, 0)),
                pl.BlockSpec((1, c_pad), lambda ph, j: (0, 0)),
                pl.BlockSpec((1, c_pad), lambda ph, j: (0, 0)),
            ],
            # output blocks only advance (and write back) during phase 2
            out_specs=pl.BlockSpec((tile_r, c_pad),
                                   lambda ph, j: (j * jnp.maximum(ph - 1, 0), 0)),
            scratch_shapes=[
                pltpu.VMEM((r_pad, c_pad), jnp.float32),   # resident conv output
                pltpu.VMEM((1, c_pad), jnp.float32),       # sum -> mean
                pltpu.VMEM((1, c_pad), jnp.float32),       # centered sum of squares
                pltpu.VMEM((2, c_pad), jnp.float32),       # scale / shift
            ],
            compiler_params=pltpu.CompilerParams(
                dimension_semantics=("arbitrary", "arbitrary"),
                vmem_limit_bytes=budget),
        )(patches, w2d, gamma2d, beta2d)
    else:
        # ---- fallback kernel 1: tiled matmul + per-tile stats partials ------
        y, s_part, q_part = pl.pallas_call(
            _matmul_stats_kernel,
            out_shape=(jax.ShapeDtypeStruct((r_pad, c_pad), jnp.float32),
                       jax.ShapeDtypeStruct((r_tiles, c_pad), jnp.float32),
                       jax.ShapeDtypeStruct((r_tiles, c_pad), jnp.float32)),
            grid=(r_tiles,),
            in_specs=[pl.BlockSpec((tile_r, k_dim), lambda i: (i, 0)),
                      pl.BlockSpec((k_dim, c_pad), lambda i: (0, 0))],
            out_specs=[pl.BlockSpec((tile_r, c_pad), lambda i: (i, 0)),
                       pl.BlockSpec((1, c_pad), lambda i: (i, 0)),
                       pl.BlockSpec((1, c_pad), lambda i: (i, 0))],
            compiler_params=pltpu.CompilerParams(
                dimension_semantics=("parallel",),
                vmem_limit_bytes=budget),
        )(patches, w2d)

        # Fold BN (train-mode batch stats) into scale/shift. Zero-padded
        # rows/channels contribute exactly zero, so dividing by r is exact.
        # TODO(synk): shifted/Welford sums to harden against |mean| >> std.
        mean = jnp.sum(s_part, axis=0) / r
        var = jnp.maximum(jnp.sum(q_part, axis=0) / r - mean * mean, 0.0)
        scale = (gamma2d[0] * jax.lax.rsqrt(var + eps)).reshape(1, c_pad)
        shift = (beta2d[0] - mean * scale[0]).reshape(1, c_pad)

        # ---- fallback kernel 2: in-place affine + LeakyReLU ------------------
        out = pl.pallas_call(
            partial(_bn_act_kernel, slope=negative_slope),
            out_shape=jax.ShapeDtypeStruct((r_pad, c_pad), jnp.float32),
            grid=(r_tiles,),
            in_specs=[pl.BlockSpec((tile_r, c_pad), lambda i: (i, 0)),
                      pl.BlockSpec((1, c_pad), lambda i: (0, 0)),
                      pl.BlockSpec((1, c_pad), lambda i: (0, 0))],
            out_specs=pl.BlockSpec((tile_r, c_pad), lambda i: (i, 0)),
            input_output_aliases={0: 0},
            compiler_params=pltpu.CompilerParams(
                dimension_semantics=("parallel",),
                vmem_limit_bytes=budget),
        )(y, scale, shift)

    out = out[:r, :cout].reshape(n, ho, wo, cout)
    return jnp.transpose(out, (0, 3, 1, 2))                 # back to NCHW


# ---------------------------------------------------------------------------
# Pure-JAX reference (same bf16 input rounding, f32 accumulation)
# ---------------------------------------------------------------------------

def ref_convx(x_nchw, w_oihw, gamma, beta, *, stride, padding, dilation,
              eps=1e-5, slope=0.01):
    x = jnp.transpose(x_nchw, (0, 2, 3, 1)).astype(jnp.bfloat16)
    w = jnp.transpose(w_oihw, (2, 3, 1, 0)).astype(jnp.bfloat16)
    y = jax.lax.conv_general_dilated(
        x, w, (stride, stride),
        padding=[(padding, padding), (padding, padding)],
        rhs_dilation=(dilation, dilation),
        dimension_numbers=('NHWC', 'HWIO', 'NHWC'),
        preferred_element_type=jnp.float32)
    m = jnp.mean(y, axis=(0, 1, 2), keepdims=True)
    v = jnp.mean((y - m) ** 2, axis=(0, 1, 2), keepdims=True)   # biased var
    z = (y - m) * jax.lax.rsqrt(v + eps) * gamma + beta
    z = jnp.where(z >= 0, z, slope * z)
    return jnp.transpose(z, (0, 3, 1, 2))


# ---------------------------------------------------------------------------

if __name__ == "__main__":
    key = jax.random.PRNGKey(0)
    k_x, k_p = jax.random.split(key)

    N, Cin, H, W = 2, 4, 16, 16
    x = jax.random.normal(k_x, (N, Cin, H, W), jnp.float32)

    cases = [
        dict(c2=32, k=3, s=1, d=1),   # Convx(4, 32, k=3)
        dict(c2=16, k=1, s=1, d=1),   # Convx(4, 16) — module defaults k=1, s=1
    ]

    for idx, cfg in enumerate(cases):
        c2, kk, ss, dd = cfg["c2"], cfg["k"], cfg["s"], cfg["d"]
        pad = autopad(kk, None, dd)
        kw_, kg, kb = jax.random.split(jax.random.fold_in(k_p, idx), 3)
        wstd = math.sqrt(2.0 / (kk * kk * c2))      # mirrors _initialize_weights
        w = wstd * jax.random.normal(kw_, (c2, Cin, kk, kk), jnp.float32)
        gamma = 1.0 + 0.1 * jax.random.normal(kg, (c2,), jnp.float32)
        beta = 0.1 * jax.random.normal(kb, (c2,), jnp.float32)

        fwd = jax.jit(partial(convx_forward, stride=ss, padding=pad, dilation=dd))
        out = jax.block_until_ready(fwd(x, w, gamma, beta))
        ref = jax.block_until_ready(
            ref_convx(x, w, gamma, beta, stride=ss, padding=pad, dilation=dd))

        assert out.shape == ref.shape, (out.shape, ref.shape)
        err = float(jnp.max(jnp.abs(out - ref)))
        assert jnp.allclose(out, ref, rtol=2e-3, atol=2e-3), err

    print("KERNEL_OK")
</pallas_src>

<mosaic_0001>
module attributes {stable_mosaic.version = 11 : i64} {
  func.func @_fused_convbn_kernel(%arg0: i32, %arg1: i32, %arg2: memref<512x36xbf16, #tpu.memory_space<vmem>>, %arg3: memref<36x128xbf16, #tpu.memory_space<vmem>>, %arg4: memref<1x128xf32, #tpu.memory_space<vmem>>, %arg5: memref<1x128xf32, #tpu.memory_space<vmem>>, %arg6: memref<512x128xf32, #tpu.memory_space<vmem>>, %arg7: memref<512x128xf32, #tpu.memory_space<vmem>>, %arg8: memref<1x128xf32, #tpu.memory_space<vmem>>, %arg9: memref<1x128xf32, #tpu.memory_space<vmem>>, %arg10: memref<2x128xf32, #tpu.memory_space<vmem>>) attributes {dimension_semantics = [#tpu.dimension_semantics<arbitrary>, #tpu.dimension_semantics<arbitrary>], iteration_bounds = array<i64: 3, 1>, scalar_prefetch = 0 : i64, scratch_operands = 4 : i64, tpu.core_type = #tpu.core_type<tc>, window_params = [{transform_indices = @transform_0, window_bounds = array<i64: 512, 36>}, {pipeline_mode = #tpu.pipeline_mode<synchronous>, transform_indices = @transform_1, window_bounds = array<i64: 36, 128>}, {pipeline_mode = #tpu.pipeline_mode<synchronous>, transform_indices = @transform_2, window_bounds = array<i64: 1, 128>}, {pipeline_mode = #tpu.pipeline_mode<synchronous>, transform_indices = @transform_3, window_bounds = array<i64: 1, 128>}, {transform_indices = @transform_4, window_bounds = array<i64: 512, 128>}]} {
    %c512_i32 = arith.constant 512 : i32
    %0 = arith.muli %arg1, %c512_i32 : i32
    %1 = tpu.assume_multiple %0, 512 : i32
    %c0_i32 = arith.constant 0 : i32
    %2 = arith.cmpi eq, %arg0, %c0_i32 : i32
    %3 = arith.extui %2 : i1 to i32
    %c0_i32_0 = arith.constant 0 : i32
    %4 = arith.cmpi ne, %3, %c0_i32_0 : i32
    scf.if %4 {
      %c0_i32_3 = arith.constant 0 : i32
      %11 = arith.cmpi eq, %arg1, %c0_i32_3 : i32
      %12 = arith.extui %11 : i1 to i32
      %c0_i32_4 = arith.constant 0 : i32
      %13 = arith.cmpi ne, %12, %c0_i32_4 : i32
      scf.if %13 {
        %cst_14 = arith.constant 0.000000e+00 : f32
        %24 = vector.broadcast %cst_14 : f32 to vector<1x128xf32>
        %c0_15 = arith.constant 0 : index
        %c0_16 = arith.constant 0 : index
        %25 = vector.load %arg8[%c0_15, %c0_16] : memref<1x128xf32, #tpu.memory_space<vmem>>, vector<1x128xf32>
        tpu.vector_store %arg8[%c0_15, %c0_16], %24 {strides = array<i32>} : memref<1x128xf32, #tpu.memory_space<vmem>>, vector<1x128xf32>,
        %cst_17 = arith.constant 0.000000e+00 : f32
        %26 = vector.broadcast %cst_17 : f32 to vector<1x128xf32>
        %c0_18 = arith.constant 0 : index
        %c0_19 = arith.constant 0 : index
        %27 = vector.load %arg9[%c0_18, %c0_19] : memref<1x128xf32, #tpu.memory_space<vmem>>, vector<1x128xf32>
        tpu.vector_store %arg9[%c0_18, %c0_19], %26 {strides = array<i32>} : memref<1x128xf32, #tpu.memory_space<vmem>>, vector<1x128xf32>,
      } else {
      }
      %c0 = arith.constant 0 : index
      %c0_5 = arith.constant 0 : index
      %14 = vector.load %arg2[%c0, %c0_5] : memref<512x36xbf16, #tpu.memory_space<vmem>>, vector<512x36xbf16>
      %c0_6 = arith.constant 0 : index
      %c0_7 = arith.constant 0 : index
      %15 = vector.load %arg3[%c0_6, %c0_7] : memref<36x128xbf16, #tpu.memory_space<vmem>>, vector<36x128xbf16>
      %cst = arith.constant dense<0.000000e+00> : vector<512x128xf32>
      %16 = tpu.matmul %14, %15, %cst {dimension_numbers = #tpu.dot_dimension_numbers<[1], [0], [0], [1], [0, 0, 1, 1], [], []>} : vector<512x36xbf16>, vector<36x128xbf16>, vector<512x128xf32> -> vector<512x128xf32>
      %17 = arith.index_cast %1 : i32 to index
      %c0_8 = arith.constant 0 : index
      %18 = vector.load %arg7[%17, %c0_8] : memref<512x128xf32, #tpu.memory_space<vmem>>, vector<512x128xf32>
      tpu.vector_store %arg7[%17, %c0_8], %16 {strides = array<i32>} : memref<512x128xf32, #tpu.memory_space<vmem>>, vector<512x128xf32>,
      %c0_9 = arith.constant 0 : index
      %c0_10 = arith.constant 0 : index
      %19 = vector.load %arg8[%c0_9, %c0_10] : memref<1x128xf32, #tpu.memory_space<vmem>>, vector<1x128xf32>
      %cst_11 = arith.constant dense<0.000000e+00> : vector<128xf32>
      %20 = vector.multi_reduction <add>, %16, %cst_11 [0] : vector<512x128xf32> to vector<128xf32>
      %21 = vector.shape_cast %20 : vector<128xf32> to vector<1x128xf32>
      %22 = arith.addf %19, %21 : vector<1x128xf32>
      %c0_12 = arith.constant 0 : index
      %c0_13 = arith.constant 0 : index
      %23 = vector.load %arg8[%c0_12, %c0_13] : memref<1x128xf32, #tpu.memory_space<vmem>>, vector<1x128xf32>
      tpu.vector_store %arg8[%c0_12, %c0_13], %22 {strides = array<i32>} : memref<1x128xf32, #tpu.memory_space<vmem>>, vector<1x128xf32>,
    } else {
    }
    %c1_i32 = arith.constant 1 : i32
    %5 = arith.cmpi eq, %arg0, %c1_i32 : i32
    %6 = arith.extui %5 : i1 to i32
    %c0_i32_1 = arith.constant 0 : i32
    %7 = arith.cmpi ne, %6, %c0_i32_1 : i32
    scf.if %7 {
      %c0_i32_3 = arith.constant 0 : i32
      %11 = arith.cmpi eq, %arg1, %c0_i32_3 : i32
      %12 = arith.extui %11 : i1 to i32
      %c0_i32_4 = arith.constant 0 : i32
      %13 = arith.cmpi ne, %12, %c0_i32_4 : i32
      scf.if %13 {
        %c0_11 = arith.constant 0 : index
        %c0_12 = arith.constant 0 : index
        %25 = vector.load %arg8[%c0_11, %c0_12] : memref<1x128xf32, #tpu.memory_space<vmem>>, vector<1x128xf32>
        %cst_13 = arith.constant 0.001953125 : f32
        %26 = vector.broadcast %cst_13 : f32 to vector<1x128xf32>
        %27 = arith.mulf %25, %26 : vector<1x128xf32>
        %c0_14 = arith.constant 0 : index
        %c0_15 = arith.constant 0 : index
        %28 = vector.load %arg8[%c0_14, %c0_15] : memref<1x128xf32, #tpu.memory_space<vmem>>, vector<1x128xf32>
        tpu.vector_store %arg8[%c0_14, %c0_15], %27 {strides = array<i32>} : memref<1x128xf32, #tpu.memory_space<vmem>>, vector<1x128xf32>,
      } else {
      }
      %14 = arith.index_cast %1 : i32 to index
      %c0 = arith.constant 0 : index
      %15 = vector.load %arg7[%14, %c0] : memref<512x128xf32, #tpu.memory_space<vmem>>, vector<512x128xf32>
      %c0_5 = arith.constant 0 : index
      %c0_6 = arith.constant 0 : index
      %16 = vector.load %arg8[%c0_5, %c0_6] : memref<1x128xf32, #tpu.memory_space<vmem>>, vector<1x128xf32>
      %17 = vector.broadcast %16 : vector<1x128xf32> to vector<512x128xf32>
      %18 = arith.subf %15, %17 : vector<512x128xf32>
      %c0_7 = arith.constant 0 : index
      %c0_8 = arith.constant 0 : index
      %19 = vector.load %arg9[%c0_7, %c0_8] : memref<1x128xf32, #tpu.memory_space<vmem>>, vector<1x128xf32>
      %20 = arith.mulf %18, %18 : vector<512x128xf32>
      %cst = arith.constant dense<0.000000e+00> : vector<128xf32>
      %21 = vector.multi_reduction <add>, %20, %cst [0] : vector<512x128xf32> to vector<128xf32>
      %22 = vector.shape_cast %21 : vector<128xf32> to vector<1x128xf32>
      %23 = arith.addf %19, %22 : vector<1x128xf32>
      %c0_9 = arith.constant 0 : index
      %c0_10 = arith.constant 0 : index
      %24 = vector.load %arg9[%c0_9, %c0_10] : memref<1x128xf32, #tpu.memory_space<vmem>>, vector<1x128xf32>
      tpu.vector_store %arg9[%c0_9, %c0_10], %23 {strides = array<i32>} : memref<1x128xf32, #tpu.memory_space<vmem>>, vector<1x128xf32>,
    } else {
    }
    %c2_i32 = arith.constant 2 : i32
    %8 = arith.cmpi eq, %arg0, %c2_i32 : i32
    %9 = arith.extui %8 : i1 to i32
    %c0_i32_2 = arith.constant 0 : i32
    %10 = arith.cmpi ne, %9, %c0_i32_2 : i32
    scf.if %10 {
      %c0_i32_3 = arith.constant 0 : i32
      %11 = arith.cmpi eq, %arg1, %c0_i32_3 : i32
      %12 = arith.extui %11 : i1 to i32
      %c0_i32_4 = arith.constant 0 : i32
      %13 = arith.cmpi ne, %12, %c0_i32_4 : i32
      scf.if %13 {
        %c0_11 = arith.constant 0 : index
        %c0_12 = arith.constant 0 : index
        %28 = vector.load %arg9[%c0_11, %c0_12] : memref<1x128xf32, #tpu.memory_space<vmem>>, vector<1x128xf32>
        %cst_13 = arith.constant 0.001953125 : f32
        %29 = vector.broadcast %cst_13 : f32 to vector<1x128xf32>
        %30 = arith.mulf %28, %29 : vector<1x128xf32>
        %c0_14 = arith.constant 0 : index
        %c0_15 = arith.constant 0 : index
        %31 = vector.load %arg4[%c0_14, %c0_15] : memref<1x128xf32, #tpu.memory_space<vmem>>, vector<1x128xf32>
        %cst_16 = arith.constant 9.99999974E-6 : f32
        %32 = vector.broadcast %cst_16 : f32 to vector<1x128xf32>
        %33 = arith.addf %30, %32 : vector<1x128xf32>
        %34 = math.rsqrt %33 : vector<1x128xf32>
        %35 = arith.mulf %31, %34 : vector<1x128xf32>
        %c0_17 = arith.constant 0 : index
        %c0_18 = arith.constant 0 : index
        %36 = vector.load %arg10[%c0_17, %c0_18] : memref<2x128xf32, #tpu.memory_space<vmem>>, vector<1x128xf32>
        tpu.vector_store %arg10[%c0_17, %c0_18], %35 {strides = array<i32>} : memref<2x128xf32, #tpu.memory_space<vmem>>, vector<1x128xf32>,
        %c0_19 = arith.constant 0 : index
        %c0_20 = arith.constant 0 : index
        %37 = vector.load %arg5[%c0_19, %c0_20] : memref<1x128xf32, #tpu.memory_space<vmem>>, vector<1x128xf32>
        %c0_21 = arith.constant 0 : index
        %c0_22 = arith.constant 0 : index
        %38 = vector.load %arg8[%c0_21, %c0_22] : memref<1x128xf32, #tpu.memory_space<vmem>>, vector<1x128xf32>
        %39 = arith.mulf %38, %35 : vector<1x128xf32>
        %40 = arith.subf %37, %39 : vector<1x128xf32>
        %c1_23 = arith.constant 1 : index
        %c0_24 = arith.constant 0 : index
        %41 = vector.load %arg10[%c1_23, %c0_24] : memref<2x128xf32, #tpu.memory_space<vmem>>, vector<1x128xf32>
        tpu.vector_store %arg10[%c1_23, %c0_24], %40 {strides = array<i32>} : memref<2x128xf32, #tpu.memory_space<vmem>>, vector<1x128xf32>,
      } else {
      }
      %14 = arith.index_cast %1 : i32 to index
      %c0 = arith.constant 0 : index
      %15 = vector.load %arg7[%14, %c0] : memref<512x128xf32, #tpu.memory_space<vmem>>, vector<512x128xf32>
      %c0_5 = arith.constant 0 : index
      %c0_6 = arith.constant 0 : index
      %16 = vector.load %arg10[%c0_5, %c0_6] : memref<2x128xf32, #tpu.memory_space<vmem>>, vector<1x128xf32>
      %17 = vector.broadcast %16 : vector<1x128xf32> to vector<512x128xf32>
      %18 = arith.mulf %15, %17 : vector<512x128xf32>
      %c1 = arith.constant 1 : index
      %c0_7 = arith.constant 0 : index
      %19 = vector.load %arg10[%c1, %c0_7] : memref<2x128xf32, #tpu.memory_space<vmem>>, vector<1x128xf32>
      %20 = vector.broadcast %19 : vector<1x128xf32> to vector<512x128xf32>
      %21 = arith.addf %18, %20 : vector<512x128xf32>
      %cst = arith.constant 0.000000e+00 : f32
      %22 = vector.broadcast %cst : f32 to vector<512x128xf32>
      %23 = arith.cmpf oge, %21, %22 : vector<512x128xf32>
      %cst_8 = arith.constant 0.00999999977 : f32
      %24 = vector.broadcast %cst_8 : f32 to vector<512x128xf32>
      %25 = arith.mulf %24, %21 : vector<512x128xf32>
      %26 = arith.select %23, %21, %25 : vector<512x128xi1>, vector<512x128xf32>
      %c0_9 = arith.constant 0 : index
      %c0_10 = arith.constant 0 : index
      %27 = vector.load %arg6[%c0_9, %c0_10] : memref<512x128xf32, #tpu.memory_space<vmem>>, vector<512x128xf32>
      tpu.vector_store %arg6[%c0_9, %c0_10], %26 {strides = array<i32>} : memref<512x128xf32, #tpu.memory_space<vmem>>, vector<512x128xf32>,
    } else {
    }
    return
  }
  func.func @transform_0(%arg0: i32, %arg1: i32) -> (i32, i32) {
    %c1_i32 = arith.constant 1 : i32
    %0 = arith.minsi %arg0, %c1_i32 : i32
    %c1_i32_0 = arith.constant 1 : i32
    %1 = arith.subi %c1_i32_0, %0 : i32
    %2 = arith.muli %arg1, %1 : i32
    %c0_i32 = arith.constant 0 : i32
    %c0_i32_1 = arith.constant 0 : i32
    return %2, %c0_i32 : i32, i32
  }
  func.func @transform_1(%arg0: i32, %arg1: i32) -> (i32, i32) {
    %c0_i32 = arith.constant 0 : i32
    %c0_i32_0 = arith.constant 0 : i32
    %c0_i32_1 = arith.constant 0 : i32
    return %c0_i32, %c0_i32_0 : i32, i32
  }
  func.func @transform_2(%arg0: i32, %arg1: i32) -> (i32, i32) {
    %c0_i32 = arith.constant 0 : i32
    %c0_i32_0 = arith.constant 0 : i32
    %c0_i32_1 = arith.constant 0 : i32
    return %c0_i32, %c0_i32_0 : i32, i32
  }
  func.func @transform_3(%arg0: i32, %arg1: i32) -> (i32, i32) {
    %c0_i32 = arith.constant 0 : i32
    %c0_i32_0 = arith.constant 0 : i32
    %c0_i32_1 = arith.constant 0 : i32
    return %c0_i32, %c0_i32_0 : i32, i32
  }
  func.func @transform_4(%arg0: i32, %arg1: i32) -> (i32, i32) {
    %c1_i32 = arith.constant 1 : i32
    %0 = arith.subi %arg0, %c1_i32 : i32
    %c0_i32 = arith.constant 0 : i32
    %1 = arith.maxsi %0, %c0_i32 : i32
    %2 = arith.muli %arg1, %1 : i32
    %c0_i32_0 = arith.constant 0 : i32
    %c0_i32_1 = arith.constant 0 : i32
    return %2, %c0_i32_0 : i32, i32
  }
}

</mosaic_0001>

<llo_original>
// kernel: convx_forward.1
$region0: #{convx_forward.1}
  #allocation0 [shape = 'u32[]', space=smem, size = 0x4, offset = 0x4, fixed_abs, tag = 'smem constant byte address 0x4 - core index']
  #allocation1 [shape = 'u32[144,128]{1,0:T(1,128)}', space=vmem, size = 0x12000, scoped, tag = 'internal scratch']
  #allocation2 [shape = 'f32[512,128]{1,0:T(8,128)}', space=vmem, size = 0x40000, scoped, tag = 'scratch operand']
  #allocation3 [shape = 'f32[1,128]{1,0:T(1,128)}', space=vmem, size = 0x200, scoped, tag = 'scratch operand']
  #allocation4 [shape = 'f32[1,128]{1,0:T(1,128)}', space=vmem, size = 0x200, scoped, tag = 'scratch operand']
  #allocation5 [shape = 'f32[2,128]{1,0:T(2,128)}', space=vmem, size = 0x400, scoped, tag = 'scratch operand']
  %s0 = inlined_call_operand.vmem [shape: bf16[512,36], index: 0, kind: input, shape index: {}]
  %s1 = inlined_call_operand.vmem [shape: bf16[36,128], index: 1, kind: input, shape index: {}]
  %s2 = inlined_call_operand.vmem [shape: f32[1,128], index: 2, kind: input, shape index: {}]
  %s3 = inlined_call_operand.vmem [shape: f32[1,128], index: 3, kind: input, shape index: {}]
  %s4 = inlined_call_operand.hbm [shape: f32[512,128], index: 4, kind: output, shape index: {}]
  %s5 = sld [smem:[#allocation0]]
  $region73: #{convx_forward.1} parent=0
    _
  %s7 = ssub.s32 1, %s5
  %s8 = scalar_select 0, %s7, %s5
  $region1: #{convx_forward.1} parent=0
    #allocation6 [shape = 'u8[524288]{0}', space=vmem, size = 0x80000, scoped, tag = 'output window, operand 0']
    #allocation7 [shape = 's32[2]{0}', space=sflag, size = 0x8, scoped, tag = 'scoped memory for convx_forward.1']
    %9 = vsyncpa [#allocation7], 0
    %s10 = scalar_lea.sflag [#allocation7], 1
    %11 = vsyncpa %s10, 0
    loop: start=0, step=1, limit=5
    $region2: #{convx_forward.1} parent=1 // loop_pre_header
      _
    $region3: #{convx_forward.1} parent=1 // loop_header
      %s13 = sphi 0, %s17
      %p14 = scmp.ge.s32.totalorder %s13, 5
      %s20 = sphi 0, %s32
      %s21 = sphi 0, %s28
      %s22 = sphi 0, %s20
      %s23 = sphi 0, %s21
      %s24 = sphi 0, %s22
      %s25 = sphi 0, %s23
      %s43 = sphi 0, %s45
      %s46 = sphi 0, %s43
      %s47 = sphi 0, %s46
      %s63 = sphi 0, %s47
      %s67 = sphi 0, %s67
      %s69 = sphi 0, %s67
      %s70 = sphi 0, %s69
      %s84 = sphi 0, %s70
      %s88 = sphi 0, %s88
      %s90 = sphi 0, %s88
      %s91 = sphi 0, %s90
      %s105 = sphi 0, %s91
      %s109 = sphi 0, %s109
      %s111 = sphi 0, %s109
      %s112 = sphi 0, %s111
      %s126 = sphi 0, %s112
      %s140 = sphi 0, %s142
      %s143 = sphi 0, %s140
      %s144 = sphi 0, %s143
      %s160 = sphi 0, %s144
    $region4: #{convx_forward.1} parent=1 // loop_header_branch
      %16 = sbr.rel (%p14) target = $region8
    $region5: #{convx_forward.1} parent=1 // loop_body
      %s18 = ssub.s32 %s13, 1
      %s19 = ssub.s32 %s13, 2
      %s26 = sadd.s32 1, %s21
      %p27 = scmp.ge.s32.totalorder %s26, 1
      %s28 = scalar_select %p27, 0, %s26
      %s29 = sadd.s32 1, %s20
      %s30 = scalar_select %p27, %s29, %s20
      %p31 = scmp.ge.s32.totalorder %s30, 3
      %s32 = scalar_select %p31, 0, %s30
      %p33 = scmp.lt.s32.totalorder %s20, 1
      %s34 = scalar_select %p33, %s20, 1
      %s35 = ssub.s32 1, %s34
      %s36 = smul.u32 %s21, %s35
      %p37 = scmp.lt.s32.totalorder %s32, 1
      %s38 = scalar_select %p37, %s32, 1
      %s39 = ssub.s32 1, %s38
      %s40 = smul.u32 %s28, %s39
      %s41 = ssub.s32 %s36, %s40
      %p42 = scmp.eq.s32.totalorder %s41, 0
      %s44 = sadd.s32 %s43, 1
      %s45 = scalar_select %p42, %s43, %s44
      %p48 = pneg %p42
      %p49 = scmp.eq.s32.totalorder %s13, 2
      %p50 = por %p48, %p49
      %p51 = scmp.ne.s32.totalorder %s43, %s46
      %p52 = scmp.eq.s32.totalorder %s13, 0
      %p53 = por %p51, %p52
      %p54 = scmp.ne.s32.totalorder %s43, %s46
      %p55 = scmp.eq.s32.totalorder %s18, 2
      %p56 = por %p54, %p55
      %p57 = scmp.ne.s32.totalorder %s46, %s47
      %p58 = scmp.eq.s32.totalorder %s18, 0
      %p59 = por %p57, %p58
      %p60 = scmp.ne.s32.totalorder %s46, %s47
      %p61 = scmp.eq.s32.totalorder %s19, 2
      %p62 = por %p60, %p61
      %p64 = scmp.ne.s32.totalorder %s47, %s63
      %p65 = scmp.eq.s32.totalorder %s19, 0
      %p66 = por %p64, %p65
      %s68 = sadd.s32 %s67, 1
      %p71 = scmp.eq.s32.totalorder %s13, 2
      %p72 = scmp.ne.s32.totalorder %s67, %s69
      %p73 = scmp.eq.s32.totalorder %s13, 0
      %p74 = por %p72, %p73
      %p75 = scmp.ne.s32.totalorder %s67, %s69
      %p76 = scmp.eq.s32.totalorder %s18, 2
      %p77 = por %p75, %p76
      %p78 = scmp.ne.s32.totalorder %s69, %s70
      %p79 = scmp.eq.s32.totalorder %s18, 0
      %p80 = por %p78, %p79
      %p81 = scmp.ne.s32.totalorder %s69, %s70
      %p82 = scmp.eq.s32.totalorder %s19, 2
      %p83 = por %p81, %p82
      %p85 = scmp.ne.s32.totalorder %s70, %s84
      %p86 = scmp.eq.s32.totalorder %s19, 0
      %p87 = por %p85, %p86
      %s89 = sadd.s32 %s88, 1
      %p92 = scmp.eq.s32.totalorder %s13, 2
      %p93 = scmp.ne.s32.totalorder %s88, %s90
      %p94 = scmp.eq.s32.totalorder %s13, 0
      %p95 = por %p93, %p94
      %p96 = scmp.ne.s32.totalorder %s88, %s90
      %p97 = scmp.eq.s32.totalorder %s18, 2
      %p98 = por %p96, %p97
      %p99 = scmp.ne.s32.totalorder %s90, %s91
      %p100 = scmp.eq.s32.totalorder %s18, 0
      %p101 = por %p99, %p100
      %p102 = scmp.ne.s32.totalorder %s90, %s91
      %p103 = scmp.eq.s32.totalorder %s19, 2
      %p104 = por %p102, %p103
      %p106 = scmp.ne.s32.totalorder %s91, %s105
      %p107 = scmp.eq.s32.totalorder %s19, 0
      %p108 = por %p106, %p107
      %s110 = sadd.s32 %s109, 1
      %p113 = scmp.eq.s32.totalorder %s13, 2
      %p114 = scmp.ne.s32.totalorder %s109, %s111
      %p115 = scmp.eq.s32.totalorder %s13, 0
      %p116 = por %p114, %p115
      %p117 = scmp.ne.s32.totalorder %s109, %s111
      %p118 = scmp.eq.s32.totalorder %s18, 2
      %p119 = por %p117, %p118
      %p120 = scmp.ne.s32.totalorder %s111, %s112
      %p121 = scmp.eq.s32.totalorder %s18, 0
      %p122 = por %p120, %p121
      %p123 = scmp.ne.s32.totalorder %s111, %s112
      %p124 = scmp.eq.s32.totalorder %s19, 2
      %p125 = por %p123, %p124
      %p127 = scmp.ne.s32.totalorder %s112, %s126
      %p128 = scmp.eq.s32.totalorder %s19, 0
      %p129 = por %p127, %p128
      %s130 = ssub.s32 %s20, 1
      %p131 = scmp.gt.s32.totalorder %s130, 0
      %s132 = scalar_select %p131, %s130, 0
      %s133 = smul.u32 %s21, %s132
      %s134 = ssub.s32 %s32, 1
      %p135 = scmp.gt.s32.totalorder %s134, 0
      %s136 = scalar_select %p135, %s134, 0
      %s137 = smul.u32 %s28, %s136
      %s138 = ssub.s32 %s133, %s137
      %p139 = scmp.eq.s32.totalorder %s138, 0
      %s141 = sadd.s32 %s140, 1
      %s142 = scalar_select %p139, %s140, %s141
      %p145 = pneg %p139
      %p146 = scmp.eq.s32.totalorder %s13, 2
      %p147 = por %p145, %p146
      %p148 = scmp.ne.s32.totalorder %s140, %s143
      %p149 = scmp.eq.s32.totalorder %s13, 0
      %p150 = por %p148, %p149
      %p151 = scmp.ne.s32.totalorder %s140, %s143
      %p152 = scmp.eq.s32.totalorder %s18, 2
      %p153 = por %p151, %p152
      %p154 = scmp.ne.s32.totalorder %s143, %s144
      %p155 = scmp.eq.s32.totalorder %s18, 0
      %p156 = por %p154, %p155
      %p157 = scmp.ne.s32.totalorder %s143, %s144
      %p158 = scmp.eq.s32.totalorder %s19, 2
      %p159 = por %p157, %p158
      %p161 = scmp.ne.s32.totalorder %s144, %s160
      %p162 = scmp.eq.s32.totalorder %s19, 0
      %p163 = por %p161, %p162
      %p164 = scmp.le.s32.totalorder 1, %s13
      %p165 = scmp.lt.s32.totalorder %s13, 4
      %p166 = pnand %p164, %p165
      %p167 = pneg %p166
      // Predicated region
      $region9: #{convx_forward.1} parent=5 // pred_check
        _
      $region10: #{convx_forward.1} parent=5 // pred_check_branch
        %169 = sbr.rel (%p166) target = $region12
      $region11: #{convx_forward.1} parent=5 // pred_region
        %s170 = ssub.s32 %s13, 1
        // Predicated region
        $region13: #{convx_forward.1} parent=11 // pred_check
          %p171 = pneg %p80
        $region14: #{convx_forward.1} parent=11 // pred_check_branch
          %173 = sbr.rel (%p171) target = $region16
        $region15: #{convx_forward.1} parent=11 // pred_region
          _
        $region16: #{convx_forward.1} parent=11 // pred_fallthru
          _
        // Predicated region
        $region17: #{convx_forward.1} parent=11 // pred_check
          %p174 = pneg %p101
        $region18: #{convx_forward.1} parent=11 // pred_check_branch
          %176 = sbr.rel (%p174) target = $region20
        $region19: #{convx_forward.1} parent=11 // pred_region
          _
        $region20: #{convx_forward.1} parent=11 // pred_fallthru
          _
        // Predicated region
        $region21: #{convx_forward.1} parent=11 // pred_check
          %p177 = pneg %p122
        $region22: #{convx_forward.1} parent=11 // pred_check_branch
          %179 = sbr.rel (%p177) target = $region24
        $region23: #{convx_forward.1} parent=11 // pred_region
          _
        $region24: #{convx_forward.1} parent=11 // pred_fallthru
          _
      $region12: #{convx_forward.1} parent=5 // pred_fallthru
        _
      %p180 = scmp.lt.s32.totalorder %s13, 3
      // Predicated region
      $region25: #{convx_forward.1} parent=5 // pred_check
        %p181 = pneg %p180
      $region26: #{convx_forward.1} parent=5 // pred_check_branch
        %183 = sbr.rel (%p181) target = $region28
      $region27: #{convx_forward.1} parent=5 // pred_region
        // Predicated region
        $region29: #{convx_forward.1} parent=27 // pred_check
          %p184 = pneg %p53
        $region30: #{convx_forward.1} parent=27 // pred_check_branch
          %186 = sbr.rel (%p184) target = $region32
        $region31: #{convx_forward.1} parent=27 // pred_region
          %p187 = scmp.lt.s32.totalorder %s20, 1
          %s188 = scalar_select %p187, %s20, 1
          %s189 = ssub.s32 1, %s188
          %s190 = smul.u32 %s21, %s189
          %s191 = smul.u32 64, %s190
          %p192 = scmp.lt.s32.totalorder %s191, 63
          %s193 = scalar_select %p192, %s191, 63
          %s194 = smul.addr %s193, 4
          %s195 = scalar_lea.vmem %s0, %s194
          %p196 = scmp.lt.s32.totalorder %s20, 1
          %s197 = scalar_select %p196, %s20, 1
          %s198 = ssub.s32 1, %s197
          %s199 = smul.u32 %s21, %s198
          %s200 = smul.u32 64, %s199
        $region32: #{convx_forward.1} parent=27 // pred_fallthru
          _
      $region28: #{convx_forward.1} parent=5 // pred_fallthru
        _
      %p201 = scmp.le.s32.totalorder 1, %s13
      %p202 = scmp.lt.s32.totalorder %s13, 4
      %p203 = pnand %p201, %p202
      %p204 = pneg %p203
      // Predicated region
      $region33: #{convx_forward.1} parent=5 // pred_check
        _
      $region34: #{convx_forward.1} parent=5 // pred_check_branch
        %206 = sbr.rel (%p203) target = $region36
      $region35: #{convx_forward.1} parent=5 // pred_region
        %s207 = ssub.s32 %s13, 1
        %p208 = scmp.lt.s32.totalorder %s22, 1
        %s209 = scalar_select %p208, %s22, 1
        %s210 = ssub.s32 1, %s209
        %s211 = smul.u32 %s23, %s210
        %s212 = smul.u32 64, %s211
        %p213 = scmp.lt.s32.totalorder %s212, 63
        %s214 = scalar_select %p213, %s212, 63
        %s215 = smul.addr %s214, 4
        %s216 = scalar_lea.vmem %s0, %s215
        %p217 = pneg %p59
        %p218 = pneg %p56
        %p219 = pneg %p80
        %p220 = pneg %p77
        %p221 = pneg %p101
        %p222 = pneg %p98
        %p223 = pneg %p122
        %p224 = pneg %p119
        %p225 = pneg %p156
        %p226 = pneg %p153
        %s227 = sand.u32 %s143, 1
        %s228 = scalar_lea.sflag [#allocation7], %s227
        %s229 = sand.u32 %s143, 1
        %s230 = smul.addr %s229, 512
        %s231 = scalar_lea.vmem [#allocation6], %s230
        %p232 = scmp.lt.s32.totalorder %s22, 1
        %s233 = scalar_select %p232, %s22, 1
        %s234 = ssub.s32 1, %s233
        %s235 = smul.u32 %s23, %s234
        %s236 = smul.u32 64, %s235
        %p237 = scmp.lt.s32.totalorder %s236, 63
        %s238 = scalar_select %p237, %s236, 63
        %s239 = smul.addr %s238, 4
        %s240 = scalar_lea.vmem %s0, %s239
        %p241 = scmp.lt.s32.totalorder %s22, 1
        %s242 = scalar_select %p241, %s22, 1
        %s243 = ssub.s32 1, %s242
        %s244 = smul.u32 %s23, %s243
        %s245 = smul.u32 64, %s244
        %s246 = ssub.s32 %s22, 1
        %p247 = scmp.gt.s32.totalorder %s246, 0
        %s248 = scalar_select %p247, %s246, 0
        %s249 = smul.u32 %s23, %s248
        %s250 = smul.u32 64, %s249
        %s252 = smul.u32 %s23, 512
        %p253 = scmp.eq.s32.totalorder %s22, 0
        // Predicated region
        $region37: #{convx_forward.1} parent=35 // pred_check
          %p254 = pneg %p253
        $region38: #{convx_forward.1} parent=35 // pred_check_branch
          %256 = sbr.rel (%p254) target = $region40
        $region39: #{convx_forward.1} parent=35 // pred_region
          %p257 = scmp.eq.s32.totalorder %s23, 0
          // Predicated region
          $region41: #{convx_forward.1} parent=39 // pred_check
            %p258 = pneg %p257
          $region42: #{convx_forward.1} parent=39 // pred_check_branch
            %260 = sbr.rel (%p258) target = $region44
          $region43: #{convx_forward.1} parent=39 // pred_region
            %261 = vst [vmem:[#allocation3] sm:$0x1] 0.0
            %262 = vst [vmem:[#allocation4] sm:$0x1] 0.0
          $region44: #{convx_forward.1} parent=39 // pred_fallthru
            _
          %v263 = vld [vmem:[%s240] sm:$0xf]
          %v264 = vld [vmem:[%s240 + $0x4] sm:$0xf]
          %v265 = vld [vmem:[%s240 + $0x8] sm:$0xf]
          %v266 = vld [vmem:[%s240 + $0xc] sm:$0xf]
          %v267 = vld [vmem:[%s240 + $0x10] sm:$0xf]
          %v268 = vld [vmem:[%s240 + $0x14] sm:$0xf]
          %v269 = vld [vmem:[%s240 + $0x18] sm:$0xf]
          %v270 = vld [vmem:[%s240 + $0x1c] sm:$0xf]
          %v271 = vld [vmem:[%s240 + $0x20] sm:$0xf]
          %v272 = vld [vmem:[%s240 + $0x24] sm:$0xf]
          %v273 = vld [vmem:[%s240 + $0x28] sm:$0xf]
          %v274 = vld [vmem:[%s240 + $0x2c] sm:$0xf]
          %v275 = vld [vmem:[%s240 + $0x30] sm:$0xf]
          %v276 = vld [vmem:[%s240 + $0x34] sm:$0xf]
          %v277 = vld [vmem:[%s240 + $0x38] sm:$0xf]
          %v278 = vld [vmem:[%s240 + $0x3c] sm:$0xf]
          %v279 = vld [vmem:[%s240 + $0x40] sm:$0xf]
          %v280 = vld [vmem:[%s240 + $0x44] sm:$0xf]
          %v281 = vld [vmem:[%s240 + $0x48] sm:$0xf]
          %v282 = vld [vmem:[%s240 + $0x4c] sm:$0xf]
          %v283 = vld [vmem:[%s240 + $0x50] sm:$0xf]
          %v284 = vld [vmem:[%s240 + $0x54] sm:$0xf]
          %v285 = vld [vmem:[%s240 + $0x58] sm:$0xf]
          %v286 = vld [vmem:[%s240 + $0x5c] sm:$0xf]
          %v287 = vld [vmem:[%s240 + $0x60] sm:$0xf]
          %v288 = vld [vmem:[%s240 + $0x64] sm:$0xf]
          %v289 = vld [vmem:[%s240 + $0x68] sm:$0xf]
          %v290 = vld [vmem:[%s240 + $0x6c] sm:$0xf]
          %v291 = vld [vmem:[%s240 + $0x70] sm:$0xf]
          %v292 = vld [vmem:[%s240 + $0x74] sm:$0xf]
          %v293 = vld [vmem:[%s240 + $0x78] sm:$0xf]
          %v294 = vld [vmem:[%s240 + $0x7c] sm:$0xf]
          %v295 = vld [vmem:[%s240 + $0x80] sm:$0xf]
          %v296 = vld [vmem:[%s240 + $0x84] sm:$0xf]
          %v297 = vld [vmem:[%s240 + $0x88] sm:$0xf]
          %v298 = vld [vmem:[%s240 + $0x8c] sm:$0xf]
          %v299 = vld [vmem:[%s240 + $0x90] sm:$0xf]
          %v300 = vld [vmem:[%s240 + $0x94] sm:$0xf]
          %v301 = vld [vmem:[%s240 + $0x98] sm:$0xf]
          %v302 = vld [vmem:[%s240 + $0x9c] sm:$0xf]
          %v303 = vld [vmem:[%s240 + $0xa0] sm:$0xf]
          %v304 = vld [vmem:[%s240 + $0xa4] sm:$0xf]
          %v305 = vld [vmem:[%s240 + $0xa8] sm:$0xf]
          %v306 = vld [vmem:[%s240 + $0xac] sm:$0xf]
          %v307 = vld [vmem:[%s240 + $0xb0] sm:$0xf]
          %v308 = vld [vmem:[%s240 + $0xb4] sm:$0xf]
          %v309 = vld [vmem:[%s240 + $0xb8] sm:$0xf]
          %v310 = vld [vmem:[%s240 + $0xbc] sm:$0xf]
          %v311 = vld [vmem:[%s240 + $0xc0] sm:$0xf]
          %v312 = vld [vmem:[%s240 + $0xc4] sm:$0xf]
          %v313 = vld [vmem:[%s240 + $0xc8] sm:$0xf]
          %v314 = vld [vmem:[%s240 + $0xcc] sm:$0xf]
          %v315 = vld [vmem:[%s240 + $0xd0] sm:$0xf]
          %v316 = vld [vmem:[%s240 + $0xd4] sm:$0xf]
          %v317 = vld [vmem:[%s240 + $0xd8] sm:$0xf]
          %v318 = vld [vmem:[%s240 + $0xdc] sm:$0xf]
          %v319 = vld [vmem:[%s240 + $0xe0] sm:$0xf]
          %v320 = vld [vmem:[%s240 + $0xe4] sm:$0xf]
          %v321 = vld [vmem:[%s240 + $0xe8] sm:$0xf]
          %v322 = vld [vmem:[%s240 + $0xec] sm:$0xf]
          %v323 = vld [vmem:[%s240 + $0xf0] sm:$0xf]
          %v324 = vld [vmem:[%s240 + $0xf4] sm:$0xf]
          %v325 = vld [vmem:[%s240 + $0xf8] sm:$0xf]
          %v326 = vld [vmem:[%s240 + $0xfc] sm:$0xf]
          %v327 = vld [vmem:[%s1] sm:$0xf]
          %v328 = vld [vmem:[%s1 + $0x4] sm:$0xf]
          %v329 = vld [vmem:[%s1 + $0x8] sm:$0xf]
          %v330 = vld [vmem:[%s1 + $0xc] sm:$0xf]
          %v331 = vld [vmem:[%s1 + $0x10] sm:$0x3]
          %v396 = vunpack.c.l.b16 %v263
          %v397 = vunpack.c.l.b16 %v264
          %v398 = vunpack.c.l.b16 %v265
          %v399 = vunpack.c.l.b16 %v266
          %v400 = vunpack.c.l.b16 %v267
          %v401 = vunpack.c.l.b16 %v268
          %v402 = vunpack.c.l.b16 %v269
          %v403 = vunpack.c.l.b16 %v270
          %v404 = vunpack.c.l.b16 %v271
          %v405 = vunpack.c.l.b16 %v272
          %v406 = vunpack.c.l.b16 %v273
          %v407 = vunpack.c.l.b16 %v274
          %v408 = vunpack.c.l.b16 %v275
          %v409 = vunpack.c.l.b16 %v276
          %v410 = vunpack.c.l.b16 %v277
          %v411 = vunpack.c.l.b16 %v278
          %v412 = vunpack.c.l.b16 %v279
          %v413 = vunpack.c.l.b16 %v280
          %v414 = vunpack.c.l.b16 %v281
          %v415 = vunpack.c.l.b16 %v282
          %v416 = vunpack.c.l.b16 %v283
          %v417 = vunpack.c.l.b16 %v284
          %v418 = vunpack.c.l.b16 %v285
          %v419 = vunpack.c.l.b16 %v286
          %v420 = vunpack.c.l.b16 %v287
          %v421 = vunpack.c.l.b16 %v288
          %v422 = vunpack.c.l.b16 %v289
          %v423 = vunpack.c.l.b16 %v290
          %v424 = vunpack.c.l.b16 %v291
          %v425 = vunpack.c.l.b16 %v292
          %v426 = vunpack.c.l.b16 %v293
          %v427 = vunpack.c.l.b16 %v294
          %v428 = vunpack.c.l.b16 %v295
          %v429 = vunpack.c.l.b16 %v296
          %v430 = vunpack.c.l.b16 %v297
          %v431 = vunpack.c.l.b16 %v298
          %v432 = vunpack.c.l.b16 %v299
          %v433 = vunpack.c.l.b16 %v300
          %v434 = vunpack.c.l.b16 %v301
          %v435 = vunpack.c.l.b16 %v302
          %v436 = vunpack.c.l.b16 %v303
          %v437 = vunpack.c.l.b16 %v304
          %v438 = vunpack.c.l.b16 %v305
          %v439 = vunpack.c.l.b16 %v306
          %v440 = vunpack.c.l.b16 %v307
          %v441 = vunpack.c.l.b16 %v308
          %v442 = vunpack.c.l.b16 %v309
          %v443 = vunpack.c.l.b16 %v310
          %v444 = vunpack.c.l.b16 %v311
          %v445 = vunpack.c.l.b16 %v312
          %v446 = vunpack.c.l.b16 %v313
          %v447 = vunpack.c.l.b16 %v314
          %v448 = vunpack.c.l.b16 %v315
          %v449 = vunpack.c.l.b16 %v316
          %v450 = vunpack.c.l.b16 %v317
          %v451 = vunpack.c.l.b16 %v318
          %v452 = vunpack.c.l.b16 %v319
          %v453 = vunpack.c.l.b16 %v320
          %v454 = vunpack.c.l.b16 %v321
          %v455 = vunpack.c.l.b16 %v322
          %v456 = vunpack.c.l.b16 %v323
          %v457 = vunpack.c.l.b16 %v324
          %v458 = vunpack.c.l.b16 %v325
          %v459 = vunpack.c.l.b16 %v326
          %v460 = vpack.c.b16 %v397, %v396
          %v461 = vpack.c.b16 %v399, %v398
          %v462 = vpack.c.b16 %v401, %v400
          %v463 = vpack.c.b16 %v403, %v402
          %v464 = vpack.c.b16 %v405, %v404
          %v465 = vpack.c.b16 %v407, %v406
          %v466 = vpack.c.b16 %v409, %v408
          %v467 = vpack.c.b16 %v411, %v410
          %v468 = vpack.c.b16 %v413, %v412
          %v469 = vpack.c.b16 %v415, %v414
          %v470 = vpack.c.b16 %v417, %v416
          %v471 = vpack.c.b16 %v419, %v418
          %v472 = vpack.c.b16 %v421, %v420
          %v473 = vpack.c.b16 %v423, %v422
          %v474 = vpack.c.b16 %v425, %v424
          %v475 = vpack.c.b16 %v427, %v426
          %v476 = vpack.c.b16 %v429, %v428
          %v477 = vpack.c.b16 %v431, %v430
          %v478 = vpack.c.b16 %v433, %v432
          %v479 = vpack.c.b16 %v435, %v434
          %v480 = vpack.c.b16 %v437, %v436
          %v481 = vpack.c.b16 %v439, %v438
          %v482 = vpack.c.b16 %v441, %v440
          %v483 = vpack.c.b16 %v443, %v442
          %v484 = vpack.c.b16 %v445, %v444
          %v485 = vpack.c.b16 %v447, %v446
          %v486 = vpack.c.b16 %v449, %v448
          %v487 = vpack.c.b16 %v451, %v450
          %v488 = vpack.c.b16 %v453, %v452
          %v489 = vpack.c.b16 %v455, %v454
          %v490 = vpack.c.b16 %v457, %v456
          %v491 = vpack.c.b16 %v459, %v458
          %v497 = vunpack.c.l.b16 %v327
          %v498 = vunpack.c.l.b16 %v328
          %v499 = vunpack.c.l.b16 %v329
          %v500 = vunpack.c.l.b16 %v330
          %v501 = vunpack.c.l.b16 %v331
          %v502 = vpack.c.b16 %v498, %v497
          %v503 = vpack.c.b16 %v500, %v499
          %v504 = vpack.c.b16 %v501, %v501
          %vm507 = vcmask 293888
          %v509 = vsel %vm507, %v460, 0
          %v512 = vsel %vm507, %v461, 0
          %v515 = vsel %vm507, %v462, 0
          %v518 = vsel %vm507, %v463, 0
          %v521 = vsel %vm507, %v464, 0
          %v524 = vsel %vm507, %v465, 0
          %v527 = vsel %vm507, %v466, 0
          %v530 = vsel %vm507, %v467, 0
          %v533 = vsel %vm507, %v468, 0
          %v536 = vsel %vm507, %v469, 0
          %v539 = vsel %vm507, %v470, 0
          %v542 = vsel %vm507, %v471, 0
          %v545 = vsel %vm507, %v472, 0
          %v548 = vsel %vm507, %v473, 0
          %v551 = vsel %vm507, %v474, 0
          %v554 = vsel %vm507, %v475, 0
          %v557 = vsel %vm507, %v476, 0
          %v560 = vsel %vm507, %v477, 0
          %v563 = vsel %vm507, %v478, 0
          %v566 = vsel %vm507, %v479, 0
          %v569 = vsel %vm507, %v480, 0
          %v572 = vsel %vm507, %v481, 0
          %v575 = vsel %vm507, %v482, 0
          %v578 = vsel %vm507, %v483, 0
          %v581 = vsel %vm507, %v484, 0
          %v584 = vsel %vm507, %v485, 0
          %v587 = vsel %vm507, %v486, 0
          %v590 = vsel %vm507, %v487, 0
          %v593 = vsel %vm507, %v488, 0
          %v596 = vsel %vm507, %v489, 0
          %v599 = vsel %vm507, %v490, 0
          %v602 = vsel %vm507, %v491, 0
          %vm604 = vcmask 1041408
          %v606 = vsel %vm604, %v504, 0
          %608 = vmatprep.subr.bf16.mxu0 0
          %609 = vmatpush1.bf16.msra.mxu0 0
          %610 = vmatprep.subr.bf16.mxu0 0
          %611 = vmatpush1.bf16.msra.mxu0 0
          %612 = vmatprep.subr.bf16.mxu0 0
          %613 = vmatpush1.bf16.msra.mxu0 0
          %614 = vmatprep.subr.bf16.mxu0 0
          %615 = vmatpush1.bf16.msra.mxu0 0
          %616 = vmatprep.subr.bf16.mxu0 0
          %617 = vmatpush1.bf16.msra.mxu0 0
          %618 = vmatprep.subr.bf16.mxu0 0
          %619 = vmatpush1.bf16.msra.mxu0 %v606
          %620 = vmatprep.subr.bf16.mxu0 0
          %621 = vmatpush1.bf16.msra.mxu0 %v503
          %622 = vmatprep.subr.bf16.mxu0 0
          %623 = vmatpush1.bf16.msra.mxu0 %v502
          %624 = vmatprep.subr.bf16.mxu0 0
          %625 = vmatpush2.bf16.msra.mxu0 0
          %626 = vmatprep.subr.bf16.mxu0 0
          %627 = vmatpush2.bf16.msra.mxu0 0
          %628 = vmatprep.subr.bf16.mxu0 0
          %629 = vmatpush2.bf16.msra.mxu0 0
          %630 = vmatprep.subr.bf16.mxu0 0
          %631 = vmatpush2.bf16.msra.mxu0 0
          %632 = vmatprep.subr.bf16.mxu0 0
          %633 = vmatpush2.bf16.msra.mxu0 0
          %634 = vmatprep.subr.bf16.mxu0 0
          %635 = vmatpush2.bf16.msra.mxu0 0
          %636 = vmatprep.subr.bf16.mxu0 0
          %637 = vmatpush2.bf16.msra.mxu0 0
          %638 = vmatprep.subr.bf16.mxu0 0
          %639 = vmatpush2.bf16.msra.mxu0 0
          %640 = vmatprep.mubr.bf16.mxu0 0
          %641 = vmatmul.mubr.bf16.gmra.mxu0 %v509
          %v642 = vpop.f32.mrf.mxu0
          %v643 = vadd.f32 0.0, %v642
          %v644 = vpop.f32.mrf.mxu0
          %v645 = vpop.f32.mrf.mxu0
          %v646 = vadd.f32 0.0, %v645
          %v647 = vpop.f32.mrf.mxu0
          %648 = vmatprep.mubr.bf16.mxu0 0
          %649 = vmatmul.mubr.bf16.gmra.mxu0 %v512
          %v650 = vpop.f32.mrf.mxu0
          %v651 = vadd.f32 0.0, %v650
          %v652 = vpop.f32.mrf.mxu0
          %v653 = vpop.f32.mrf.mxu0
          %v654 = vadd.f32 0.0, %v653
          %v655 = vpop.f32.mrf.mxu0
          %656 = vmatprep.mubr.bf16.mxu0 0
          %657 = vmatmul.mubr.bf16.gmra.mxu0 %v515
          %v658 = vpop.f32.mrf.mxu0
          %v659 = vadd.f32 0.0, %v658
          %v660 = vpop.f32.mrf.mxu0
          %v661 = vpop.f32.mrf.mxu0
          %v662 = vadd.f32 0.0, %v661
          %v663 = vpop.f32.mrf.mxu0
          %664 = vmatprep.mubr.bf16.mxu0 0
          %665 = vmatmul.mubr.bf16.gmra.mxu0 %v518
          %v666 = vpop.f32.mrf.mxu0
          %v667 = vadd.f32 0.0, %v666
          %v668 = vpop.f32.mrf.mxu0
          %v669 = vpop.f32.mrf.mxu0
          %v670 = vadd.f32 0.0, %v669
          %v671 = vpop.f32.mrf.mxu0
          %672 = vmatprep.mubr.bf16.mxu0 0
          %673 = vmatmul.mubr.bf16.gmra.mxu0 %v521
          %v674 = vpop.f32.mrf.mxu0
          %v675 = vadd.f32 0.0, %v674
          %v676 = vpop.f32.mrf.mxu0
          %v677 = vpop.f32.mrf.mxu0
          %v678 = vadd.f32 0.0, %v677
          %v679 = vpop.f32.mrf.mxu0
          %680 = vmatprep.mubr.bf16.mxu0 0
          %681 = vmatmul.mubr.bf16.gmra.mxu0 %v524
          %v682 = vpop.f32.mrf.mxu0
          %v683 = vadd.f32 0.0, %v682
          %v684 = vpop.f32.mrf.mxu0
          %v685 = vpop.f32.mrf.mxu0
          %v686 = vadd.f32 0.0, %v685
          %v687 = vpop.f32.mrf.mxu0
          %688 = vmatprep.mubr.bf16.mxu0 0
          %689 = vmatmul.mubr.bf16.gmra.mxu0 %v527
          %v690 = vpop.f32.mrf.mxu0
          %v691 = vadd.f32 0.0, %v690
          %v692 = vpop.f32.mrf.mxu0
          %v693 = vpop.f32.mrf.mxu0
          %v694 = vadd.f32 0.0, %v693
          %v695 = vpop.f32.mrf.mxu0
          %696 = vmatprep.mubr.bf16.mxu0 0
          %697 = vmatmul.mubr.bf16.gmra.mxu0 %v530
          %v698 = vpop.f32.mrf.mxu0
          %v699 = vadd.f32 0.0, %v698
          %v700 = vpop.f32.mrf.mxu0
          %v701 = vpop.f32.mrf.mxu0
          %v702 = vadd.f32 0.0, %v701
          %v703 = vpop.f32.mrf.mxu0
          %704 = vmatprep.mubr.bf16.mxu0 0
          %705 = vmatmul.mubr.bf16.gmra.mxu0 %v533
          %v706 = vpop.f32.mrf.mxu0
          %v707 = vadd.f32 0.0, %v706
          %v708 = vpop.f32.mrf.mxu0
          %v709 = vpop.f32.mrf.mxu0
          %v710 = vadd.f32 0.0, %v709
          %v711 = vpop.f32.mrf.mxu0
          %712 = vmatprep.mubr.bf16.mxu0 0
          %713 = vmatmul.mubr.bf16.gmra.mxu0 %v536
          %v714 = vpop.f32.mrf.mxu0
          %v715 = vadd.f32 0.0, %v714
          %v716 = vpop.f32.mrf.mxu0
          %v717 = vpop.f32.mrf.mxu0
          %v718 = vadd.f32 0.0, %v717
          %v719 = vpop.f32.mrf.mxu0
          %720 = vmatprep.mubr.bf16.mxu0 0
          %721 = vmatmul.mubr.bf16.gmra.mxu0 %v539
          %v722 = vpop.f32.mrf.mxu0
          %v723 = vadd.f32 0.0, %v722
          %v724 = vpop.f32.mrf.mxu0
          %v725 = vpop.f32.mrf.mxu0
          %v726 = vadd.f32 0.0, %v725
          %v727 = vpop.f32.mrf.mxu0
          %728 = vmatprep.mubr.bf16.mxu0 0
          %729 = vmatmul.mubr.bf16.gmra.mxu0 %v542
          %v730 = vpop.f32.mrf.mxu0
          %v731 = vadd.f32 0.0, %v730
          %v732 = vpop.f32.mrf.mxu0
          %v733 = vpop.f32.mrf.mxu0
          %v734 = vadd.f32 0.0, %v733
          %v735 = vpop.f32.mrf.mxu0
          %736 = vmatprep.mubr.bf16.mxu0 0
          %737 = vmatmul.mubr.bf16.gmra.mxu0 %v545
          %v738 = vpop.f32.mrf.mxu0
          %v739 = vadd.f32 0.0, %v738
          %v740 = vpop.f32.mrf.mxu0
          %v741 = vpop.f32.mrf.mxu0
          %v742 = vadd.f32 0.0, %v741
          %v743 = vpop.f32.mrf.mxu0
          %744 = vmatprep.mubr.bf16.mxu0 0
          %745 = vmatmul.mubr.bf16.gmra.mxu0 %v548
          %v746 = vpop.f32.mrf.mxu0
          %v747 = vadd.f32 0.0, %v746
          %v748 = vpop.f32.mrf.mxu0
          %v749 = vpop.f32.mrf.mxu0
          %v750 = vadd.f32 0.0, %v749
          %v751 = vpop.f32.mrf.mxu0
          %752 = vmatprep.mubr.bf16.mxu0 0
          %753 = vmatmul.mubr.bf16.gmra.mxu0 %v551
          %v754 = vpop.f32.mrf.mxu0
          %v755 = vadd.f32 0.0, %v754
          %v756 = vpop.f32.mrf.mxu0
          %v757 = vpop.f32.mrf.mxu0
          %v758 = vadd.f32 0.0, %v757
          %v759 = vpop.f32.mrf.mxu0
          %760 = vmatprep.mubr.bf16.mxu0 0
          %761 = vmatmul.mubr.bf16.gmra.mxu0 %v554
          %v762 = vpop.f32.mrf.mxu0
          %v763 = vadd.f32 0.0, %v762
          %v764 = vpop.f32.mrf.mxu0
          %v765 = vpop.f32.mrf.mxu0
          %v766 = vadd.f32 0.0, %v765
          %v767 = vpop.f32.mrf.mxu0
          %768 = vmatprep.mubr.bf16.mxu0 0
          %769 = vmatmul.mubr.bf16.gmra.mxu0 %v557
          %v770 = vpop.f32.mrf.mxu0
          %v771 = vadd.f32 0.0, %v770
          %v772 = vpop.f32.mrf.mxu0
          %v773 = vpop.f32.mrf.mxu0
          %v774 = vadd.f32 0.0, %v773
          %v775 = vpop.f32.mrf.mxu0
          %776 = vmatprep.mubr.bf16.mxu0 0
          %777 = vmatmul.mubr.bf16.gmra.mxu0 %v560
          %v778 = vpop.f32.mrf.mxu0
          %v779 = vadd.f32 0.0, %v778
          %v780 = vpop.f32.mrf.mxu0
          %v781 = vpop.f32.mrf.mxu0
          %v782 = vadd.f32 0.0, %v781
          %v783 = vpop.f32.mrf.mxu0
          %784 = vmatprep.mubr.bf16.mxu0 0
          %785 = vmatmul.mubr.bf16.gmra.mxu0 %v563
          %v786 = vpop.f32.mrf.mxu0
          %v787 = vadd.f32 0.0, %v786
          %v788 = vpop.f32.mrf.mxu0
          %v789 = vpop.f32.mrf.mxu0
          %v790 = vadd.f32 0.0, %v789
          %v791 = vpop.f32.mrf.mxu0
          %792 = vmatprep.mubr.bf16.mxu0 0
          %793 = vmatmul.mubr.bf16.gmra.mxu0 %v566
          %v794 = vpop.f32.mrf.mxu0
          %v795 = vadd.f32 0.0, %v794
          %v796 = vpop.f32.mrf.mxu0
          %v797 = vpop.f32.mrf.mxu0
          %v798 = vadd.f32 0.0, %v797
          %v799 = vpop.f32.mrf.mxu0
          %800 = vmatprep.mubr.bf16.mxu0 0
          %801 = vmatmul.mubr.bf16.gmra.mxu0 %v569
          %v802 = vpop.f32.mrf.mxu0
          %v803 = vadd.f32 0.0, %v802
          %v804 = vpop.f32.mrf.mxu0
          %v805 = vpop.f32.mrf.mxu0
          %v806 = vadd.f32 0.0, %v805
          %v807 = vpop.f32.mrf.mxu0
          %808 = vmatprep.mubr.bf16.mxu0 0
          %809 = vmatmul.mubr.bf16.gmra.mxu0 %v572
          %v810 = vpop.f32.mrf.mxu0
          %v811 = vadd.f32 0.0, %v810
          %v812 = vpop.f32.mrf.mxu0
          %v813 = vpop.f32.mrf.mxu0
          %v814 = vadd.f32 0.0, %v813
          %v815 = vpop.f32.mrf.mxu0
          %816 = vmatprep.mubr.bf16.mxu0 0
          %817 = vmatmul.mubr.bf16.gmra.mxu0 %v575
          %v818 = vpop.f32.mrf.mxu0
          %v819 = vadd.f32 0.0, %v818
          %v820 = vpop.f32.mrf.mxu0
          %v821 = vpop.f32.mrf.mxu0
          %v822 = vadd.f32 0.0, %v821
          %v823 = vpop.f32.mrf.mxu0
          %824 = vmatprep.mubr.bf16.mxu0 0
          %825 = vmatmul.mubr.bf16.gmra.mxu0 %v578
          %v826 = vpop.f32.mrf.mxu0
          %v827 = vadd.f32 0.0, %v826
          %v828 = vpop.f32.mrf.mxu0
          %v829 = vpop.f32.mrf.mxu0
          %v830 = vadd.f32 0.0, %v829
          %v831 = vpop.f32.mrf.mxu0
          %832 = vmatprep.mubr.bf16.mxu0 0
          %833 = vmatmul.mubr.bf16.gmra.mxu0 %v581
          %v834 = vpop.f32.mrf.mxu0
          %v835 = vadd.f32 0.0, %v834
          %v836 = vpop.f32.mrf.mxu0
          %v837 = vpop.f32.mrf.mxu0
          %v838 = vadd.f32 0.0, %v837
          %v839 = vpop.f32.mrf.mxu0
          %840 = vmatprep.mubr.bf16.mxu0 0
          %841 = vmatmul.mubr.bf16.gmra.mxu0 %v584
          %v842 = vpop.f32.mrf.mxu0
          %v843 = vadd.f32 0.0, %v842
          %v844 = vpop.f32.mrf.mxu0
          %v845 = vpop.f32.mrf.mxu0
          %v846 = vadd.f32 0.0, %v845
          %v847 = vpop.f32.mrf.mxu0
          %848 = vmatprep.mubr.bf16.mxu0 0
          %849 = vmatmul.mubr.bf16.gmra.mxu0 %v587
          %v850 = vpop.f32.mrf.mxu0
          %v851 = vadd.f32 0.0, %v850
          %v852 = vpop.f32.mrf.mxu0
          %v853 = vpop.f32.mrf.mxu0
          %v854 = vadd.f32 0.0, %v853
          %v855 = vpop.f32.mrf.mxu0
          %856 = vmatprep.mubr.bf16.mxu0 0
          %857 = vmatmul.mubr.bf16.gmra.mxu0 %v590
          %v858 = vpop.f32.mrf.mxu0
          %v859 = vadd.f32 0.0, %v858
          %v860 = vpop.f32.mrf.mxu0
          %v861 = vpop.f32.mrf.mxu0
          %v862 = vadd.f32 0.0, %v861
          %v863 = vpop.f32.mrf.mxu0
          %864 = vmatprep.mubr.bf16.mxu0 0
          %865 = vmatmul.mubr.bf16.gmra.mxu0 %v593
          %v866 = vpop.f32.mrf.mxu0
          %v867 = vadd.f32 0.0, %v866
          %v868 = vpop.f32.mrf.mxu0
          %v869 = vpop.f32.mrf.mxu0
          %v870 = vadd.f32 0.0, %v869
          %v871 = vpop.f32.mrf.mxu0
          %872 = vmatprep.mubr.bf16.mxu0 0
          %873 = vmatmul.mubr.bf16.gmra.mxu0 %v596
          %v874 = vpop.f32.mrf.mxu0
          %v875 = vadd.f32 0.0, %v874
          %v876 = vpop.f32.mrf.mxu0
          %v877 = vpop.f32.mrf.mxu0
          %v878 = vadd.f32 0.0, %v877
          %v879 = vpop.f32.mrf.mxu0
          %880 = vmatprep.mubr.bf16.mxu0 0
          %881 = vmatmul.mubr.bf16.gmra.mxu0 %v599
          %v882 = vpop.f32.mrf.mxu0
          %v883 = vadd.f32 0.0, %v882
          %v884 = vpop.f32.mrf.mxu0
          %v885 = vpop.f32.mrf.mxu0
          %v886 = vadd.f32 0.0, %v885
          %v887 = vpop.f32.mrf.mxu0
          %888 = vmatprep.mubr.bf16.mxu0 0
          %889 = vmatmul.mubr.bf16.gmra.mxu0 %v602
          %v890 = vpop.f32.mrf.mxu0
          %v891 = vadd.f32 0.0, %v890
          %v892 = vpop.f32.mrf.mxu0
          %v893 = vpop.f32.mrf.mxu0
          %v894 = vadd.f32 0.0, %v893
          %v895 = vpop.f32.mrf.mxu0
          %896 = vdwg.mxu0
          %s897 = scalar_lea.vmem [#allocation2], %s252
          %898 = vst [vmem:[%s897] sm:$0xff] %v643
          %899 = vst [vmem:[%s897 + $0x8] sm:$0xff] %v646
          %900 = vst [vmem:[%s897 + $0x10] sm:$0xff] %v651
          %901 = vst [vmem:[%s897 + $0x18] sm:$0xff] %v654
          %902 = vst [vmem:[%s897 + $0x20] sm:$0xff] %v659
          %903 = vst [vmem:[%s897 + $0x28] sm:$0xff] %v662
          %904 = vst [vmem:[%s897 + $0x30] sm:$0xff] %v667
          %905 = vst [vmem:[%s897 + $0x38] sm:$0xff] %v670
          %906 = vst [vmem:[%s897 + $0x40] sm:$0xff] %v675
          %907 = vst [vmem:[%s897 + $0x48] sm:$0xff] %v678
          %908 = vst [vmem:[%s897 + $0x50] sm:$0xff] %v683
          %909 = vst [vmem:[%s897 + $0x58] sm:$0xff] %v686
          %910 = vst [vmem:[%s897 + $0x60] sm:$0xff] %v691
          %911 = vst [vmem:[%s897 + $0x68] sm:$0xff] %v694
          %912 = vst [vmem:[%s897 + $0x70] sm:$0xff] %v699
          %913 = vst [vmem:[%s897 + $0x78] sm:$0xff] %v702
          %914 = vst [vmem:[%s897 + $0x80] sm:$0xff] %v707
          %915 = vst [vmem:[%s897 + $0x88] sm:$0xff] %v710
          %916 = vst [vmem:[%s897 + $0x90] sm:$0xff] %v715
          %917 = vst [vmem:[%s897 + $0x98] sm:$0xff] %v718
          %918 = vst [vmem:[%s897 + $0xa0] sm:$0xff] %v723
          %919 = vst [vmem:[%s897 + $0xa8] sm:$0xff] %v726
          %920 = vst [vmem:[%s897 + $0xb0] sm:$0xff] %v731
          %921 = vst [vmem:[%s897 + $0xb8] sm:$0xff] %v734
          %922 = vst [vmem:[%s897 + $0xc0] sm:$0xff] %v739
          %923 = vst [vmem:[%s897 + $0xc8] sm:$0xff] %v742
          %924 = vst [vmem:[%s897 + $0xd0] sm:$0xff] %v747
          %925 = vst [vmem:[%s897 + $0xd8] sm:$0xff] %v750
          %926 = vst [vmem:[%s897 + $0xe0] sm:$0xff] %v755
          %927 = vst [vmem:[%s897 + $0xe8] sm:$0xff] %v758
          %928 = vst [vmem:[%s897 + $0xf0] sm:$0xff] %v763
          %929 = vst [vmem:[%s897 + $0xf8] sm:$0xff] %v766
          %930 = vst [vmem:[%s897 + $0x100] sm:$0xff] %v771
          %931 = vst [vmem:[%s897 + $0x108] sm:$0xff] %v774
          %932 = vst [vmem:[%s897 + $0x110] sm:$0xff] %v779
          %933 = vst [vmem:[%s897 + $0x118] sm:$0xff] %v782
          %934 = vst [vmem:[%s897 + $0x120] sm:$0xff] %v787
          %935 = vst [vmem:[%s897 + $0x128] sm:$0xff] %v790
          %936 = vst [vmem:[%s897 + $0x130] sm:$0xff] %v795
          %937 = vst [vmem:[%s897 + $0x138] sm:$0xff] %v798
          %938 = vst [vmem:[%s897 + $0x140] sm:$0xff] %v803
          %939 = vst [vmem:[%s897 + $0x148] sm:$0xff] %v806
          %940 = vst [vmem:[%s897 + $0x150] sm:$0xff] %v811
          %941 = vst [vmem:[%s897 + $0x158] sm:$0xff] %v814
          %942 = vst [vmem:[%s897 + $0x160] sm:$0xff] %v819
          %943 = vst [vmem:[%s897 + $0x168] sm:$0xff] %v822
          %944 = vst [vmem:[%s897 + $0x170] sm:$0xff] %v827
          %945 = vst [vmem:[%s897 + $0x178] sm:$0xff] %v830
          %946 = vst [vmem:[%s897 + $0x180] sm:$0xff] %v835
          %947 = vst [vmem:[%s897 + $0x188] sm:$0xff] %v838
          %948 = vst [vmem:[%s897 + $0x190] sm:$0xff] %v843
          %949 = vst [vmem:[%s897 + $0x198] sm:$0xff] %v846
          %950 = vst [vmem:[%s897 + $0x1a0] sm:$0xff] %v851
          %951 = vst [vmem:[%s897 + $0x1a8] sm:$0xff] %v854
          %952 = vst [vmem:[%s897 + $0x1b0] sm:$0xff] %v859
          %953 = vst [vmem:[%s897 + $0x1b8] sm:$0xff] %v862
          %954 = vst [vmem:[%s897 + $0x1c0] sm:$0xff] %v867
          %955 = vst [vmem:[%s897 + $0x1c8] sm:$0xff] %v870
          %956 = vst [vmem:[%s897 + $0x1d0] sm:$0xff] %v875
          %957 = vst [vmem:[%s897 + $0x1d8] sm:$0xff] %v878
          %958 = vst [vmem:[%s897 + $0x1e0] sm:$0xff] %v883
          %959 = vst [vmem:[%s897 + $0x1e8] sm:$0xff] %v886
          %960 = vst [vmem:[%s897 + $0x1f0] sm:$0xff] %v891
          %961 = vst [vmem:[%s897 + $0x1f8] sm:$0xff] %v894
          %v962 = vld [vmem:[#allocation3] sm:$0x1]
          %v963 = vadd.f32 %v643, %v646
          %v964 = vadd.f32 %v963, %v651
          %v965 = vadd.f32 %v964, %v654
          %v966 = vadd.f32 %v965, %v659
          %v967 = vadd.f32 %v966, %v662
          %v968 = vadd.f32 %v967, %v667
          %v969 = vadd.f32 %v968, %v670
          %v970 = vadd.f32 %v969, %v675
          %v971 = vadd.f32 %v970, %v678
          %v972 = vadd.f32 %v971, %v683
          %v973 = vadd.f32 %v972, %v686
          %v974 = vadd.f32 %v973, %v691
          %v975 = vadd.f32 %v974, %v694
          %v976 = vadd.f32 %v975, %v699
          %v977 = vadd.f32 %v976, %v702
          %v978 = vadd.f32 %v977, %v707
          %v979 = vadd.f32 %v978, %v710
          %v980 = vadd.f32 %v979, %v715
          %v981 = vadd.f32 %v980, %v718
          %v982 = vadd.f32 %v981, %v723
          %v983 = vadd.f32 %v982, %v726
          %v984 = vadd.f32 %v983, %v731
          %v985 = vadd.f32 %v984, %v734
          %v986 = vadd.f32 %v985, %v739
          %v987 = vadd.f32 %v986, %v742
          %v988 = vadd.f32 %v987, %v747
          %v989 = vadd.f32 %v988, %v750
          %v990 = vadd.f32 %v989, %v755
          %v991 = vadd.f32 %v990, %v758
          %v992 = vadd.f32 %v991, %v763
          %v993 = vadd.f32 %v992, %v766
          %v994 = vadd.f32 %v993, %v771
          %v995 = vadd.f32 %v994, %v774
          %v996 = vadd.f32 %v995, %v779
          %v997 = vadd.f32 %v996, %v782
          %v998 = vadd.f32 %v997, %v787
          %v999 = vadd.f32 %v998, %v790
          %v1000 = vadd.f32 %v999, %v795
          %v1001 = vadd.f32 %v1000, %v798
          %v1002 = vadd.f32 %v1001, %v803
          %v1003 = vadd.f32 %v1002, %v806
          %v1004 = vadd.f32 %v1003, %v811
          %v1005 = vadd.f32 %v1004, %v814
          %v1006 = vadd.f32 %v1005, %v819
          %v1007 = vadd.f32 %v1006, %v822
          %v1008 = vadd.f32 %v1007, %v827
          %v1009 = vadd.f32 %v1008, %v830
          %v1010 = vadd.f32 %v1009, %v835
          %v1011 = vadd.f32 %v1010, %v838
          %v1012 = vadd.f32 %v1011, %v843
          %v1013 = vadd.f32 %v1012, %v846
          %v1014 = vadd.f32 %v1013, %v851
          %v1015 = vadd.f32 %v1014, %v854
          %v1016 = vadd.f32 %v1015, %v859
          %v1017 = vadd.f32 %v1016, %v862
          %v1018 = vadd.f32 %v1017, %v867
          %v1019 = vadd.f32 %v1018, %v870
          %v1020 = vadd.f32 %v1019, %v875
          %v1021 = vadd.f32 %v1020, %v878
          %v1022 = vadd.f32 %v1021, %v883
          %v1023 = vadd.f32 %v1022, %v886
          %v1024 = vadd.f32 %v1023, %v891
          %v1025 = vadd.f32 %v1024, %v894
          %v1026 = vrot.slane %v1025, 4
          %v1027 = vadd.f32 %v1025, %v1026
          %v1028 = vrot.slane %v1027, 2
          %v1029 = vadd.f32 %v1027, %v1028
          %v1030 = vrot.slane %v1029, 1
          %v1031 = vadd.f32 %v1029, %v1030
          %v1032 = vadd.f32 %v962, %v1031
          %1033 = vst [vmem:[#allocation3] sm:$0x1] %v1032
        $region40: #{convx_forward.1} parent=35 // pred_fallthru
          _
        %p1034 = scmp.eq.s32.totalorder %s22, 1
        // Predicated region
        $region45: #{convx_forward.1} parent=35 // pred_check
          %p1035 = pneg %p1034
        $region46: #{convx_forward.1} parent=35 // pred_check_branch
          %1037 = sbr.rel (%p1035) target = $region48
        $region47: #{convx_forward.1} parent=35 // pred_region
          %p1038 = scmp.eq.s32.totalorder %s23, 0
          // Predicated region
          $region49: #{convx_forward.1} parent=47 // pred_check
            %p1039 = pneg %p1038
          $region50: #{convx_forward.1} parent=47 // pred_check_branch
            %1041 = sbr.rel (%p1039) target = $region52
          $region51: #{convx_forward.1} parent=47 // pred_region
            %v1042 = vld [vmem:[#allocation3] sm:$0x1]
            %v1043 = vmul.f32 %v1042, 0.001953125
            %1044 = vst [vmem:[#allocation3] sm:$0x1] %v1043
          $region52: #{convx_forward.1} parent=47 // pred_fallthru
            _
          %s1045 = scalar_lea.vmem [#allocation2], %s252
          %v1046 = vld [vmem:[%s1045] sm:$0xff]
          %v1047 = vld [vmem:[%s1045 + $0x8] sm:$0xff]
          %v1048 = vld [vmem:[%s1045 + $0x10] sm:$0xff]
          %v1049 = vld [vmem:[%s1045 + $0x18] sm:$0xff]
          %v1050 = vld [vmem:[%s1045 + $0x20] sm:$0xff]
          %v1051 = vld [vmem:[%s1045 + $0x28] sm:$0xff]
          %v1052 = vld [vmem:[%s1045 + $0x30] sm:$0xff]
          %v1053 = vld [vmem:[%s1045 + $0x38] sm:$0xff]
          %v1054 = vld [vmem:[%s1045 + $0x40] sm:$0xff]
          %v1055 = vld [vmem:[%s1045 + $0x48] sm:$0xff]
          %v1056 = vld [vmem:[%s1045 + $0x50] sm:$0xff]
          %v1057 = vld [vmem:[%s1045 + $0x58] sm:$0xff]
          %v1058 = vld [vmem:[%s1045 + $0x60] sm:$0xff]
          %v1059 = vld [vmem:[%s1045 + $0x68] sm:$0xff]
          %v1060 = vld [vmem:[%s1045 + $0x70] sm:$0xff]
          %v1061 = vld [vmem:[%s1045 + $0x78] sm:$0xff]
          %v1062 = vld [vmem:[%s1045 + $0x80] sm:$0xff]
          %v1063 = vld [vmem:[%s1045 + $0x88] sm:$0xff]
          %v1064 = vld [vmem:[%s1045 + $0x90] sm:$0xff]
          %v1065 = vld [vmem:[%s1045 + $0x98] sm:$0xff]
          %v1066 = vld [vmem:[%s1045 + $0xa0] sm:$0xff]
          %v1067 = vld [vmem:[%s1045 + $0xa8] sm:$0xff]
          %v1068 = vld [vmem:[%s1045 + $0xb0] sm:$0xff]
          %v1069 = vld [vmem:[%s1045 + $0xb8] sm:$0xff]
          %v1070 = vld [vmem:[%s1045 + $0xc0] sm:$0xff]
          %v1071 = vld [vmem:[%s1045 + $0xc8] sm:$0xff]
          %v1072 = vld [vmem:[%s1045 + $0xd0] sm:$0xff]
          %v1073 = vld [vmem:[%s1045 + $0xd8] sm:$0xff]
          %v1074 = vld [vmem:[%s1045 + $0xe0] sm:$0xff]
          %v1075 = vld [vmem:[%s1045 + $0xe8] sm:$0xff]
          %v1076 = vld [vmem:[%s1045 + $0xf0] sm:$0xff]
          %v1077 = vld [vmem:[%s1045 + $0xf8] sm:$0xff]
          %v1078 = vld [vmem:[%s1045 + $0x100] sm:$0xff]
          %v1079 = vld [vmem:[%s1045 + $0x108] sm:$0xff]
          %v1080 = vld [vmem:[%s1045 + $0x110] sm:$0xff]
          %v1081 = vld [vmem:[%s1045 + $0x118] sm:$0xff]
          %v1082 = vld [vmem:[%s1045 + $0x120] sm:$0xff]
          %v1083 = vld [vmem:[%s1045 + $0x128] sm:$0xff]
          %v1084 = vld [vmem:[%s1045 + $0x130] sm:$0xff]
          %v1085 = vld [vmem:[%s1045 + $0x138] sm:$0xff]
          %v1086 = vld [vmem:[%s1045 + $0x140] sm:$0xff]
          %v1087 = vld [vmem:[%s1045 + $0x148] sm:$0xff]
          %v1088 = vld [vmem:[%s1045 + $0x150] sm:$0xff]
          %v1089 = vld [vmem:[%s1045 + $0x158] sm:$0xff]
          %v1090 = vld [vmem:[%s1045 + $0x160] sm:$0xff]
          %v1091 = vld [vmem:[%s1045 + $0x168] sm:$0xff]
          %v1092 = vld [vmem:[%s1045 + $0x170] sm:$0xff]
          %v1093 = vld [vmem:[%s1045 + $0x178] sm:$0xff]
          %v1094 = vld [vmem:[%s1045 + $0x180] sm:$0xff]
          %v1095 = vld [vmem:[%s1045 + $0x188] sm:$0xff]
          %v1096 = vld [vmem:[%s1045 + $0x190] sm:$0xff]
          %v1097 = vld [vmem:[%s1045 + $0x198] sm:$0xff]
          %v1098 = vld [vmem:[%s1045 + $0x1a0] sm:$0xff]
          %v1099 = vld [vmem:[%s1045 + $0x1a8] sm:$0xff]
          %v1100 = vld [vmem:[%s1045 + $0x1b0] sm:$0xff]
          %v1101 = vld [vmem:[%s1045 + $0x1b8] sm:$0xff]
          %v1102 = vld [vmem:[%s1045 + $0x1c0] sm:$0xff]
          %v1103 = vld [vmem:[%s1045 + $0x1c8] sm:$0xff]
          %v1104 = vld [vmem:[%s1045 + $0x1d0] sm:$0xff]
          %v1105 = vld [vmem:[%s1045 + $0x1d8] sm:$0xff]
          %v1106 = vld [vmem:[%s1045 + $0x1e0] sm:$0xff]
          %v1107 = vld [vmem:[%s1045 + $0x1e8] sm:$0xff]
          %v1108 = vld [vmem:[%s1045 + $0x1f0] sm:$0xff]
          %v1109 = vld [vmem:[%s1045 + $0x1f8] sm:$0xff]
          %v1110 = vld [vmem:[#allocation3] sm:$0x1]
          %v1112 = vlaneseq
          %v1113 = vshrl.u32 %v1112, 7
          %v1114 = vsub.s32 0, %v1113
          %v1115 = vrot.slane %v1110, %v1114
          %v1117 = vsub.f32 %v1046, %v1115
          %v1118 = vsub.f32 %v1047, %v1115
          %v1119 = vsub.f32 %v1048, %v1115
          %v1120 = vsub.f32 %v1049, %v1115
          %v1121 = vsub.f32 %v1050, %v1115
          %v1122 = vsub.f32 %v1051, %v1115
          %v1123 = vsub.f32 %v1052, %v1115
          %v1124 = vsub.f32 %v1053, %v1115
          %v1125 = vsub.f32 %v1054, %v1115
          %v1126 = vsub.f32 %v1055, %v1115
          %v1127 = vsub.f32 %v1056, %v1115
          %v1128 = vsub.f32 %v1057, %v1115
          %v1129 = vsub.f32 %v1058, %v1115
          %v1130 = vsub.f32 %v1059, %v1115
          %v1131 = vsub.f32 %v1060, %v1115
          %v1132 = vsub.f32 %v1061, %v1115
          %v1133 = vsub.f32 %v1062, %v1115
          %v1134 = vsub.f32 %v1063, %v1115
          %v1135 = vsub.f32 %v1064, %v1115
          %v1136 = vsub.f32 %v1065, %v1115
          %v1137 = vsub.f32 %v1066, %v1115
          %v1138 = vsub.f32 %v1067, %v1115
          %v1139 = vsub.f32 %v1068, %v1115
          %v1140 = vsub.f32 %v1069, %v1115
          %v1141 = vsub.f32 %v1070, %v1115
          %v1142 = vsub.f32 %v1071, %v1115
          %v1143 = vsub.f32 %v1072, %v1115
          %v1144 = vsub.f32 %v1073, %v1115
          %v1145 = vsub.f32 %v1074, %v1115
          %v1146 = vsub.f32 %v1075, %v1115
          %v1147 = vsub.f32 %v1076, %v1115
          %v1148 = vsub.f32 %v1077, %v1115
          %v1149 = vsub.f32 %v1078, %v1115
          %v1150 = vsub.f32 %v1079, %v1115
          %v1151 = vsub.f32 %v1080, %v1115
          %v1152 = vsub.f32 %v1081, %v1115
          %v1153 = vsub.f32 %v1082, %v1115
          %v1154 = vsub.f32 %v1083, %v1115
          %v1155 = vsub.f32 %v1084, %v1115
          %v1156 = vsub.f32 %v1085, %v1115
          %v1157 = vsub.f32 %v1086, %v1115
          %v1158 = vsub.f32 %v1087, %v1115
          %v1159 = vsub.f32 %v1088, %v1115
          %v1160 = vsub.f32 %v1089, %v1115
          %v1161 = vsub.f32 %v1090, %v1115
          %v1162 = vsub.f32 %v1091, %v1115
          %v1163 = vsub.f32 %v1092, %v1115
          %v1164 = vsub.f32 %v1093, %v1115
          %v1165 = vsub.f32 %v1094, %v1115
          %v1166 = vsub.f32 %v1095, %v1115
          %v1167 = vsub.f32 %v1096, %v1115
          %v1168 = vsub.f32 %v1097, %v1115
          %v1169 = vsub.f32 %v1098, %v1115
          %v1170 = vsub.f32 %v1099, %v1115
          %v1171 = vsub.f32 %v1100, %v1115
          %v1172 = vsub.f32 %v1101, %v1115
          %v1173 = vsub.f32 %v1102, %v1115
          %v1174 = vsub.f32 %v1103, %v1115
          %v1175 = vsub.f32 %v1104, %v1115
          %v1176 = vsub.f32 %v1105, %v1115
          %v1177 = vsub.f32 %v1106, %v1115
          %v1178 = vsub.f32 %v1107, %v1115
          %v1179 = vsub.f32 %v1108, %v1115
          %v1180 = vsub.f32 %v1109, %v1115
          %v1181 = vld [vmem:[#allocation4] sm:$0x1]
          %v1182 = vmul.f32 %v1117, %v1117
          %v1183 = vmul.f32 %v1118, %v1118
          %v1184 = vmul.f32 %v1119, %v1119
          %v1185 = vmul.f32 %v1120, %v1120
          %v1186 = vmul.f32 %v1121, %v1121
          %v1187 = vmul.f32 %v1122, %v1122
          %v1188 = vmul.f32 %v1123, %v1123
          %v1189 = vmul.f32 %v1124, %v1124
          %v1190 = vmul.f32 %v1125, %v1125
          %v1191 = vmul.f32 %v1126, %v1126
          %v1192 = vmul.f32 %v1127, %v1127
          %v1193 = vmul.f32 %v1128, %v1128
          %v1194 = vmul.f32 %v1129, %v1129
          %v1195 = vmul.f32 %v1130, %v1130
          %v1196 = vmul.f32 %v1131, %v1131
          %v1197 = vmul.f32 %v1132, %v1132
          %v1198 = vmul.f32 %v1133, %v1133
          %v1199 = vmul.f32 %v1134, %v1134
          %v1200 = vmul.f32 %v1135, %v1135
          %v1201 = vmul.f32 %v1136, %v1136
          %v1202 = vmul.f32 %v1137, %v1137
          %v1203 = vmul.f32 %v1138, %v1138
          %v1204 = vmul.f32 %v1139, %v1139
          %v1205 = vmul.f32 %v1140, %v1140
          %v1206 = vmul.f32 %v1141, %v1141
          %v1207 = vmul.f32 %v1142, %v1142
          %v1208 = vmul.f32 %v1143, %v1143
          %v1209 = vmul.f32 %v1144, %v1144
          %v1210 = vmul.f32 %v1145, %v1145
          %v1211 = vmul.f32 %v1146, %v1146
          %v1212 = vmul.f32 %v1147, %v1147
          %v1213 = vmul.f32 %v1148, %v1148
          %v1214 = vmul.f32 %v1149, %v1149
          %v1215 = vmul.f32 %v1150, %v1150
          %v1216 = vmul.f32 %v1151, %v1151
          %v1217 = vmul.f32 %v1152, %v1152
          %v1218 = vmul.f32 %v1153, %v1153
          %v1219 = vmul.f32 %v1154, %v1154
          %v1220 = vmul.f32 %v1155, %v1155
          %v1221 = vmul.f32 %v1156, %v1156
          %v1222 = vmul.f32 %v1157, %v1157
          %v1223 = vmul.f32 %v1158, %v1158
          %v1224 = vmul.f32 %v1159, %v1159
          %v1225 = vmul.f32 %v1160, %v1160
          %v1226 = vmul.f32 %v1161, %v1161
          %v1227 = vmul.f32 %v1162, %v1162
          %v1228 = vmul.f32 %v1163, %v1163
          %v1229 = vmul.f32 %v1164, %v1164
          %v1230 = vmul.f32 %v1165, %v1165
          %v1231 = vmul.f32 %v1166, %v1166
          %v1232 = vmul.f32 %v1167, %v1167
          %v1233 = vmul.f32 %v1168, %v1168
          %v1234 = vmul.f32 %v1169, %v1169
          %v1235 = vmul.f32 %v1170, %v1170
          %v1236 = vmul.f32 %v1171, %v1171
          %v1237 = vmul.f32 %v1172, %v1172
          %v1238 = vmul.f32 %v1173, %v1173
          %v1239 = vmul.f32 %v1174, %v1174
          %v1240 = vmul.f32 %v1175, %v1175
          %v1241 = vmul.f32 %v1176, %v1176
          %v1242 = vmul.f32 %v1177, %v1177
          %v1243 = vmul.f32 %v1178, %v1178
          %v1244 = vmul.f32 %v1179, %v1179
          %v1245 = vmul.f32 %v1180, %v1180
          %v1246 = vadd.f32 %v1182, %v1183
          %v1247 = vadd.f32 %v1246, %v1184
          %v1248 = vadd.f32 %v1247, %v1185
          %v1249 = vadd.f32 %v1248, %v1186
          %v1250 = vadd.f32 %v1249, %v1187
          %v1251 = vadd.f32 %v1250, %v1188
          %v1252 = vadd.f32 %v1251, %v1189
          %v1253 = vadd.f32 %v1252, %v1190
          %v1254 = vadd.f32 %v1253, %v1191
          %v1255 = vadd.f32 %v1254, %v1192
          %v1256 = vadd.f32 %v1255, %v1193
          %v1257 = vadd.f32 %v1256, %v1194
          %v1258 = vadd.f32 %v1257, %v1195
          %v1259 = vadd.f32 %v1258, %v1196
          %v1260 = vadd.f32 %v1259, %v1197
          %v1261 = vadd.f32 %v1260, %v1198
          %v1262 = vadd.f32 %v1261, %v1199
          %v1263 = vadd.f32 %v1262, %v1200
          %v1264 = vadd.f32 %v1263, %v1201
          %v1265 = vadd.f32 %v1264, %v1202
          %v1266 = vadd.f32 %v1265, %v1203
          %v1267 = vadd.f32 %v1266, %v1204
          %v1268 = vadd.f32 %v1267, %v1205
          %v1269 = vadd.f32 %v1268, %v1206
          %v1270 = vadd.f32 %v1269, %v1207
          %v1271 = vadd.f32 %v1270, %v1208
          %v1272 = vadd.f32 %v1271, %v1209
          %v1273 = vadd.f32 %v1272, %v1210
          %v1274 = vadd.f32 %v1273, %v1211
          %v1275 = vadd.f32 %v1274, %v1212
          %v1276 = vadd.f32 %v1275, %v1213
          %v1277 = vadd.f32 %v1276, %v1214
          %v1278 = vadd.f32 %v1277, %v1215
          %v1279 = vadd.f32 %v1278, %v1216
          %v1280 = vadd.f32 %v1279, %v1217
          %v1281 = vadd.f32 %v1280, %v1218
          %v1282 = vadd.f32 %v1281, %v1219
          %v1283 = vadd.f32 %v1282, %v1220
          %v1284 = vadd.f32 %v1283, %v1221
          %v1285 = vadd.f32 %v1284, %v1222
          %v1286 = vadd.f32 %v1285, %v1223
          %v1287 = vadd.f32 %v1286, %v1224
          %v1288 = vadd.f32 %v1287, %v1225
          %v1289 = vadd.f32 %v1288, %v1226
          %v1290 = vadd.f32 %v1289, %v1227
          %v1291 = vadd.f32 %v1290, %v1228
          %v1292 = vadd.f32 %v1291, %v1229
          %v1293 = vadd.f32 %v1292, %v1230
          %v1294 = vadd.f32 %v1293, %v1231
          %v1295 = vadd.f32 %v1294, %v1232
          %v1296 = vadd.f32 %v1295, %v1233
          %v1297 = vadd.f32 %v1296, %v1234
          %v1298 = vadd.f32 %v1297, %v1235
          %v1299 = vadd.f32 %v1298, %v1236
          %v1300 = vadd.f32 %v1299, %v1237
          %v1301 = vadd.f32 %v1300, %v1238
          %v1302 = vadd.f32 %v1301, %v1239
          %v1303 = vadd.f32 %v1302, %v1240
          %v1304 = vadd.f32 %v1303, %v1241
          %v1305 = vadd.f32 %v1304, %v1242
          %v1306 = vadd.f32 %v1305, %v1243
          %v1307 = vadd.f32 %v1306, %v1244
          %v1308 = vadd.f32 %v1307, %v1245
          %v1309 = vrot.slane %v1308, 4
          %v1310 = vadd.f32 %v1308, %v1309
          %v1311 = vrot.slane %v1310, 2
          %v1312 = vadd.f32 %v1310, %v1311
          %v1313 = vrot.slane %v1312, 1
          %v1314 = vadd.f32 %v1312, %v1313
          %v1315 = vadd.f32 %v1181, %v1314
          %1316 = vst [vmem:[#allocation4] sm:$0x1] %v1315
        $region48: #{convx_forward.1} parent=35 // pred_fallthru
          _
        %p1317 = scmp.eq.s32.totalorder %s22, 2
        // Predicated region
        $region53: #{convx_forward.1} parent=35 // pred_check
          %p1318 = pneg %p1317
        $region54: #{convx_forward.1} parent=35 // pred_check_branch
          %1320 = sbr.rel (%p1318) target = $region56
        $region55: #{convx_forward.1} parent=35 // pred_region
          %p1321 = scmp.eq.s32.totalorder %s23, 0
          // Predicated region
          $region57: #{convx_forward.1} parent=55 // pred_check
            %p1322 = pneg %p1321
          $region58: #{convx_forward.1} parent=55 // pred_check_branch
            %1324 = sbr.rel (%p1322) target = $region60
          $region59: #{convx_forward.1} parent=55 // pred_region
            %v1325 = vld [vmem:[#allocation4] sm:$0x1]
            %v1326 = vmul.f32 %v1325, 0.001953125
            %v1327 = vld [vmem:[%s2] sm:$0x1]
            %v1328 = vadd.f32 %v1326, 1e-05
            %v1329 = vrsqrt.pop %v1328
            %v1330 = vmul.f32 %v1327, %v1329
            %1331 = vst [vmem:[#allocation5] sm:$0x1] %v1330
            %v1332 = vld [vmem:[%s3] sm:$0x1]
            %v1333 = vld [vmem:[#allocation3] sm:$0x1]
            %v1334 = vmul.f32 %v1333, %v1330
            %v1335 = vsub.f32 %v1332, %v1334
            %1336 = vst [vmem:[#allocation5 + $0x1] sm:$0x1] %v1335
          $region60: #{convx_forward.1} parent=55 // pred_fallthru
            _
          %s1337 = scalar_lea.vmem [#allocation2], %s252
          %v1338 = vld [vmem:[%s1337] sm:$0xff]
          %v1339 = vld [vmem:[%s1337 + $0x8] sm:$0xff]
          %v1340 = vld [vmem:[%s1337 + $0x10] sm:$0xff]
          %v1341 = vld [vmem:[%s1337 + $0x18] sm:$0xff]
          %v1342 = vld [vmem:[%s1337 + $0x20] sm:$0xff]
          %v1343 = vld [vmem:[%s1337 + $0x28] sm:$0xff]
          %v1344 = vld [vmem:[%s1337 + $0x30] sm:$0xff]
          %v1345 = vld [vmem:[%s1337 + $0x38] sm:$0xff]
          %v1346 = vld [vmem:[%s1337 + $0x40] sm:$0xff]
          %v1347 = vld [vmem:[%s1337 + $0x48] sm:$0xff]
          %v1348 = vld [vmem:[%s1337 + $0x50] sm:$0xff]
          %v1349 = vld [vmem:[%s1337 + $0x58] sm:$0xff]
          %v1350 = vld [vmem:[%s1337 + $0x60] sm:$0xff]
          %v1351 = vld [vmem:[%s1337 + $0x68] sm:$0xff]
          %v1352 = vld [vmem:[%s1337 + $0x70] sm:$0xff]
          %v1353 = vld [vmem:[%s1337 + $0x78] sm:$0xff]
          %v1354 = vld [vmem:[%s1337 + $0x80] sm:$0xff]
          %v1355 = vld [vmem:[%s1337 + $0x88] sm:$0xff]
          %v1356 = vld [vmem:[%s1337 + $0x90] sm:$0xff]
          %v1357 = vld [vmem:[%s1337 + $0x98] sm:$0xff]
          %v1358 = vld [vmem:[%s1337 + $0xa0] sm:$0xff]
          %v1359 = vld [vmem:[%s1337 + $0xa8] sm:$0xff]
          %v1360 = vld [vmem:[%s1337 + $0xb0] sm:$0xff]
          %v1361 = vld [vmem:[%s1337 + $0xb8] sm:$0xff]
          %v1362 = vld [vmem:[%s1337 + $0xc0] sm:$0xff]
          %v1363 = vld [vmem:[%s1337 + $0xc8] sm:$0xff]
          %v1364 = vld [vmem:[%s1337 + $0xd0] sm:$0xff]
          %v1365 = vld [vmem:[%s1337 + $0xd8] sm:$0xff]
          %v1366 = vld [vmem:[%s1337 + $0xe0] sm:$0xff]
          %v1367 = vld [vmem:[%s1337 + $0xe8] sm:$0xff]
          %v1368 = vld [vmem:[%s1337 + $0xf0] sm:$0xff]
          %v1369 = vld [vmem:[%s1337 + $0xf8] sm:$0xff]
          %v1370 = vld [vmem:[%s1337 + $0x100] sm:$0xff]
          %v1371 = vld [vmem:[%s1337 + $0x108] sm:$0xff]
          %v1372 = vld [vmem:[%s1337 + $0x110] sm:$0xff]
          %v1373 = vld [vmem:[%s1337 + $0x118] sm:$0xff]
          %v1374 = vld [vmem:[%s1337 + $0x120] sm:$0xff]
          %v1375 = vld [vmem:[%s1337 + $0x128] sm:$0xff]
          %v1376 = vld [vmem:[%s1337 + $0x130] sm:$0xff]
          %v1377 = vld [vmem:[%s1337 + $0x138] sm:$0xff]
          %v1378 = vld [vmem:[%s1337 + $0x140] sm:$0xff]
          %v1379 = vld [vmem:[%s1337 + $0x148] sm:$0xff]
          %v1380 = vld [vmem:[%s1337 + $0x150] sm:$0xff]
          %v1381 = vld [vmem:[%s1337 + $0x158] sm:$0xff]
          %v1382 = vld [vmem:[%s1337 + $0x160] sm:$0xff]
          %v1383 = vld [vmem:[%s1337 + $0x168] sm:$0xff]
          %v1384 = vld [vmem:[%s1337 + $0x170] sm:$0xff]
          %v1385 = vld [vmem:[%s1337 + $0x178] sm:$0xff]
          %v1386 = vld [vmem:[%s1337 + $0x180] sm:$0xff]
          %v1387 = vld [vmem:[%s1337 + $0x188] sm:$0xff]
          %v1388 = vld [vmem:[%s1337 + $0x190] sm:$0xff]
          %v1389 = vld [vmem:[%s1337 + $0x198] sm:$0xff]
          %v1390 = vld [vmem:[%s1337 + $0x1a0] sm:$0xff]
          %v1391 = vld [vmem:[%s1337 + $0x1a8] sm:$0xff]
          %v1392 = vld [vmem:[%s1337 + $0x1b0] sm:$0xff]
          %v1393 = vld [vmem:[%s1337 + $0x1b8] sm:$0xff]
          %v1394 = vld [vmem:[%s1337 + $0x1c0] sm:$0xff]
          %v1395 = vld [vmem:[%s1337 + $0x1c8] sm:$0xff]
          %v1396 = vld [vmem:[%s1337 + $0x1d0] sm:$0xff]
          %v1397 = vld [vmem:[%s1337 + $0x1d8] sm:$0xff]
          %v1398 = vld [vmem:[%s1337 + $0x1e0] sm:$0xff]
          %v1399 = vld [vmem:[%s1337 + $0x1e8] sm:$0xff]
          %v1400 = vld [vmem:[%s1337 + $0x1f0] sm:$0xff]
          %v1401 = vld [vmem:[%s1337 + $0x1f8] sm:$0xff]
          %v1402 = vld [vmem:[#allocation5] sm:$0x1]
          %v1403 = vlaneseq
          %v1404 = vshrl.u32 %v1403, 7
          %v1405 = vsub.s32 0, %v1404
          %v1406 = vrot.slane %v1402, %v1405
          %v1407 = vmul.f32 %v1338, %v1406
          %v1408 = vmul.f32 %v1339, %v1406
          %v1409 = vmul.f32 %v1340, %v1406
          %v1410 = vmul.f32 %v1341, %v1406
          %v1411 = vmul.f32 %v1342, %v1406
          %v1412 = vmul.f32 %v1343, %v1406
          %v1413 = vmul.f32 %v1344, %v1406
          %v1414 = vmul.f32 %v1345, %v1406
          %v1415 = vmul.f32 %v1346, %v1406
          %v1416 = vmul.f32 %v1347, %v1406
          %v1417 = vmul.f32 %v1348, %v1406
          %v1418 = vmul.f32 %v1349, %v1406
          %v1419 = vmul.f32 %v1350, %v1406
          %v1420 = vmul.f32 %v1351, %v1406
          %v1421 = vmul.f32 %v1352, %v1406
          %v1422 = vmul.f32 %v1353, %v1406
          %v1423 = vmul.f32 %v1354, %v1406
          %v1424 = vmul.f32 %v1355, %v1406
          %v1425 = vmul.f32 %v1356, %v1406
          %v1426 = vmul.f32 %v1357, %v1406
          %v1427 = vmul.f32 %v1358, %v1406
          %v1428 = vmul.f32 %v1359, %v1406
          %v1429 = vmul.f32 %v1360, %v1406
          %v1430 = vmul.f32 %v1361, %v1406
          %v1431 = vmul.f32 %v1362, %v1406
          %v1432 = vmul.f32 %v1363, %v1406
          %v1433 = vmul.f32 %v1364, %v1406
          %v1434 = vmul.f32 %v1365, %v1406
          %v1435 = vmul.f32 %v1366, %v1406
          %v1436 = vmul.f32 %v1367, %v1406
          %v1437 = vmul.f32 %v1368, %v1406
          %v1438 = vmul.f32 %v1369, %v1406
          %v1439 = vmul.f32 %v1370, %v1406
          %v1440 = vmul.f32 %v1371, %v1406
          %v1441 = vmul.f32 %v1372, %v1406
          %v1442 = vmul.f32 %v1373, %v1406
          %v1443 = vmul.f32 %v1374, %v1406
          %v1444 = vmul.f32 %v1375, %v1406
          %v1445 = vmul.f32 %v1376, %v1406
          %v1446 = vmul.f32 %v1377, %v1406
          %v1447 = vmul.f32 %v1378, %v1406
          %v1448 = vmul.f32 %v1379, %v1406
          %v1449 = vmul.f32 %v1380, %v1406
          %v1450 = vmul.f32 %v1381, %v1406
          %v1451 = vmul.f32 %v1382, %v1406
          %v1452 = vmul.f32 %v1383, %v1406
          %v1453 = vmul.f32 %v1384, %v1406
          %v1454 = vmul.f32 %v1385, %v1406
          %v1455 = vmul.f32 %v1386, %v1406
          %v1456 = vmul.f32 %v1387, %v1406
          %v1457 = vmul.f32 %v1388, %v1406
          %v1458 = vmul.f32 %v1389, %v1406
          %v1459 = vmul.f32 %v1390, %v1406
          %v1460 = vmul.f32 %v1391, %v1406
          %v1461 = vmul.f32 %v1392, %v1406
          %v1462 = vmul.f32 %v1393, %v1406
          %v1463 = vmul.f32 %v1394, %v1406
          %v1464 = vmul.f32 %v1395, %v1406
          %v1465 = vmul.f32 %v1396, %v1406
          %v1466 = vmul.f32 %v1397, %v1406
          %v1467 = vmul.f32 %v1398, %v1406
          %v1468 = vmul.f32 %v1399, %v1406
          %v1469 = vmul.f32 %v1400, %v1406
          %v1470 = vmul.f32 %v1401, %v1406
          %v1471 = vld [vmem:[#allocation5 + $0x1] sm:$0x1]
          %v1472 = vlaneseq
          %v1473 = vshrl.u32 %v1472, 7
          %v1474 = vsub.s32 0, %v1473
          %v1475 = vrot.slane %v1471, %v1474
          %v1476 = vadd.f32 %v1407, %v1475
          %v1477 = vadd.f32 %v1408, %v1475
          %v1478 = vadd.f32 %v1409, %v1475
          %v1479 = vadd.f32 %v1410, %v1475
          %v1480 = vadd.f32 %v1411, %v1475
          %v1481 = vadd.f32 %v1412, %v1475
          %v1482 = vadd.f32 %v1413, %v1475
          %v1483 = vadd.f32 %v1414, %v1475
          %v1484 = vadd.f32 %v1415, %v1475
          %v1485 = vadd.f32 %v1416, %v1475
          %v1486 = vadd.f32 %v1417, %v1475
          %v1487 = vadd.f32 %v1418, %v1475
          %v1488 = vadd.f32 %v1419, %v1475
          %v1489 = vadd.f32 %v1420, %v1475
          %v1490 = vadd.f32 %v1421, %v1475
          %v1491 = vadd.f32 %v1422, %v1475
          %v1492 = vadd.f32 %v1423, %v1475
          %v1493 = vadd.f32 %v1424, %v1475
          %v1494 = vadd.f32 %v1425, %v1475
          %v1495 = vadd.f32 %v1426, %v1475
          %v1496 = vadd.f32 %v1427, %v1475
          %v1497 = vadd.f32 %v1428, %v1475
          %v1498 = vadd.f32 %v1429, %v1475
          %v1499 = vadd.f32 %v1430, %v1475
          %v1500 = vadd.f32 %v1431, %v1475
          %v1501 = vadd.f32 %v1432, %v1475
          %v1502 = vadd.f32 %v1433, %v1475
          %v1503 = vadd.f32 %v1434, %v1475
          %v1504 = vadd.f32 %v1435, %v1475
          %v1505 = vadd.f32 %v1436, %v1475
          %v1506 = vadd.f32 %v1437, %v1475
          %v1507 = vadd.f32 %v1438, %v1475
          %v1508 = vadd.f32 %v1439, %v1475
          %v1509 = vadd.f32 %v1440, %v1475
          %v1510 = vadd.f32 %v1441, %v1475
          %v1511 = vadd.f32 %v1442, %v1475
          %v1512 = vadd.f32 %v1443, %v1475
          %v1513 = vadd.f32 %v1444, %v1475
          %v1514 = vadd.f32 %v1445, %v1475
          %v1515 = vadd.f32 %v1446, %v1475
          %v1516 = vadd.f32 %v1447, %v1475
          %v1517 = vadd.f32 %v1448, %v1475
          %v1518 = vadd.f32 %v1449, %v1475
          %v1519 = vadd.f32 %v1450, %v1475
          %v1520 = vadd.f32 %v1451, %v1475
          %v1521 = vadd.f32 %v1452, %v1475
          %v1522 = vadd.f32 %v1453, %v1475
          %v1523 = vadd.f32 %v1454, %v1475
          %v1524 = vadd.f32 %v1455, %v1475
          %v1525 = vadd.f32 %v1456, %v1475
          %v1526 = vadd.f32 %v1457, %v1475
          %v1527 = vadd.f32 %v1458, %v1475
          %v1528 = vadd.f32 %v1459, %v1475
          %v1529 = vadd.f32 %v1460, %v1475
          %v1530 = vadd.f32 %v1461, %v1475
          %v1531 = vadd.f32 %v1462, %v1475
          %v1532 = vadd.f32 %v1463, %v1475
          %v1533 = vadd.f32 %v1464, %v1475
          %v1534 = vadd.f32 %v1465, %v1475
          %v1535 = vadd.f32 %v1466, %v1475
          %v1536 = vadd.f32 %v1467, %v1475
          %v1537 = vadd.f32 %v1468, %v1475
          %v1538 = vadd.f32 %v1469, %v1475
          %v1539 = vadd.f32 %v1470, %v1475
          %vm1540 = vcmp.ge.f32.partialorder %v1476, 0.0
          %vm1541 = vcmp.ge.f32.partialorder %v1477, 0.0
          %vm1542 = vcmp.ge.f32.partialorder %v1478, 0.0
          %vm1543 = vcmp.ge.f32.partialorder %v1479, 0.0
          %vm1544 = vcmp.ge.f32.partialorder %v1480, 0.0
          %vm1545 = vcmp.ge.f32.partialorder %v1481, 0.0
          %vm1546 = vcmp.ge.f32.partialorder %v1482, 0.0
          %vm1547 = vcmp.ge.f32.partialorder %v1483, 0.0
          %vm1548 = vcmp.ge.f32.partialorder %v1484, 0.0
          %vm1549 = vcmp.ge.f32.partialorder %v1485, 0.0
          %vm1550 = vcmp.ge.f32.partialorder %v1486, 0.0
          %vm1551 = vcmp.ge.f32.partialorder %v1487, 0.0
          %vm1552 = vcmp.ge.f32.partialorder %v1488, 0.0
          %vm1553 = vcmp.ge.f32.partialorder %v1489, 0.0
          %vm1554 = vcmp.ge.f32.partialorder %v1490, 0.0
          %vm1555 = vcmp.ge.f32.partialorder %v1491, 0.0
          %vm1556 = vcmp.ge.f32.partialorder %v1492, 0.0
          %vm1557 = vcmp.ge.f32.partialorder %v1493, 0.0
          %vm1558 = vcmp.ge.f32.partialorder %v1494, 0.0
          %vm1559 = vcmp.ge.f32.partialorder %v1495, 0.0
          %vm1560 = vcmp.ge.f32.partialorder %v1496, 0.0
          %vm1561 = vcmp.ge.f32.partialorder %v1497, 0.0
          %vm1562 = vcmp.ge.f32.partialorder %v1498, 0.0
          %vm1563 = vcmp.ge.f32.partialorder %v1499, 0.0
          %vm1564 = vcmp.ge.f32.partialorder %v1500, 0.0
          %vm1565 = vcmp.ge.f32.partialorder %v1501, 0.0
          %vm1566 = vcmp.ge.f32.partialorder %v1502, 0.0
          %vm1567 = vcmp.ge.f32.partialorder %v1503, 0.0
          %vm1568 = vcmp.ge.f32.partialorder %v1504, 0.0
          %vm1569 = vcmp.ge.f32.partialorder %v1505, 0.0
          %vm1570 = vcmp.ge.f32.partialorder %v1506, 0.0
          %vm1571 = vcmp.ge.f32.partialorder %v1507, 0.0
          %vm1572 = vcmp.ge.f32.partialorder %v1508, 0.0
          %vm1573 = vcmp.ge.f32.partialorder %v1509, 0.0
          %vm1574 = vcmp.ge.f32.partialorder %v1510, 0.0
          %vm1575 = vcmp.ge.f32.partialorder %v1511, 0.0
          %vm1576 = vcmp.ge.f32.partialorder %v1512, 0.0
          %vm1577 = vcmp.ge.f32.partialorder %v1513, 0.0
          %vm1578 = vcmp.ge.f32.partialorder %v1514, 0.0
          %vm1579 = vcmp.ge.f32.partialorder %v1515, 0.0
          %vm1580 = vcmp.ge.f32.partialorder %v1516, 0.0
          %vm1581 = vcmp.ge.f32.partialorder %v1517, 0.0
          %vm1582 = vcmp.ge.f32.partialorder %v1518, 0.0
          %vm1583 = vcmp.ge.f32.partialorder %v1519, 0.0
          %vm1584 = vcmp.ge.f32.partialorder %v1520, 0.0
          %vm1585 = vcmp.ge.f32.partialorder %v1521, 0.0
          %vm1586 = vcmp.ge.f32.partialorder %v1522, 0.0
          %vm1587 = vcmp.ge.f32.partialorder %v1523, 0.0
          %vm1588 = vcmp.ge.f32.partialorder %v1524, 0.0
          %vm1589 = vcmp.ge.f32.partialorder %v1525, 0.0
          %vm1590 = vcmp.ge.f32.partialorder %v1526, 0.0
          %vm1591 = vcmp.ge.f32.partialorder %v1527, 0.0
          %vm1592 = vcmp.ge.f32.partialorder %v1528, 0.0
          %vm1593 = vcmp.ge.f32.partialorder %v1529, 0.0
          %vm1594 = vcmp.ge.f32.partialorder %v1530, 0.0
          %vm1595 = vcmp.ge.f32.partialorder %v1531, 0.0
          %vm1596 = vcmp.ge.f32.partialorder %v1532, 0.0
          %vm1597 = vcmp.ge.f32.partialorder %v1533, 0.0
          %vm1598 = vcmp.ge.f32.partialorder %v1534, 0.0
          %vm1599 = vcmp.ge.f32.partialorder %v1535, 0.0
          %vm1600 = vcmp.ge.f32.partialorder %v1536, 0.0
          %vm1601 = vcmp.ge.f32.partialorder %v1537, 0.0
          %vm1602 = vcmp.ge.f32.partialorder %v1538, 0.0
          %vm1603 = vcmp.ge.f32.partialorder %v1539, 0.0
          %v1604 = vmul.f32 %v1476, 0.01
          %v1605 = vmul.f32 %v1477, 0.01
          %v1606 = vmul.f32 %v1478, 0.01
          %v1607 = vmul.f32 %v1479, 0.01
          %v1608 = vmul.f32 %v1480, 0.01
          %v1609 = vmul.f32 %v1481, 0.01
          %v1610 = vmul.f32 %v1482, 0.01
          %v1611 = vmul.f32 %v1483, 0.01
          %v1612 = vmul.f32 %v1484, 0.01
          %v1613 = vmul.f32 %v1485, 0.01
          %v1614 = vmul.f32 %v1486, 0.01
          %v1615 = vmul.f32 %v1487, 0.01
          %v1616 = vmul.f32 %v1488, 0.01
          %v1617 = vmul.f32 %v1489, 0.01
          %v1618 = vmul.f32 %v1490, 0.01
          %v1619 = vmul.f32 %v1491, 0.01
          %v1620 = vmul.f32 %v1492, 0.01
          %v1621 = vmul.f32 %v1493, 0.01
          %v1622 = vmul.f32 %v1494, 0.01
          %v1623 = vmul.f32 %v1495, 0.01
          %v1624 = vmul.f32 %v1496, 0.01
          %v1625 = vmul.f32 %v1497, 0.01
          %v1626 = vmul.f32 %v1498, 0.01
          %v1627 = vmul.f32 %v1499, 0.01
          %v1628 = vmul.f32 %v1500, 0.01
          %v1629 = vmul.f32 %v1501, 0.01
          %v1630 = vmul.f32 %v1502, 0.01
          %v1631 = vmul.f32 %v1503, 0.01
          %v1632 = vmul.f32 %v1504, 0.01
          %v1633 = vmul.f32 %v1505, 0.01
          %v1634 = vmul.f32 %v1506, 0.01
          %v1635 = vmul.f32 %v1507, 0.01
          %v1636 = vmul.f32 %v1508, 0.01
          %v1637 = vmul.f32 %v1509, 0.01
          %v1638 = vmul.f32 %v1510, 0.01
          %v1639 = vmul.f32 %v1511, 0.01
          %v1640 = vmul.f32 %v1512, 0.01
          %v1641 = vmul.f32 %v1513, 0.01
          %v1642 = vmul.f32 %v1514, 0.01
          %v1643 = vmul.f32 %v1515, 0.01
          %v1644 = vmul.f32 %v1516, 0.01
          %v1645 = vmul.f32 %v1517, 0.01
          %v1646 = vmul.f32 %v1518, 0.01
          %v1647 = vmul.f32 %v1519, 0.01
          %v1648 = vmul.f32 %v1520, 0.01
          %v1649 = vmul.f32 %v1521, 0.01
          %v1650 = vmul.f32 %v1522, 0.01
          %v1651 = vmul.f32 %v1523, 0.01
          %v1652 = vmul.f32 %v1524, 0.01
          %v1653 = vmul.f32 %v1525, 0.01
          %v1654 = vmul.f32 %v1526, 0.01
          %v1655 = vmul.f32 %v1527, 0.01
          %v1656 = vmul.f32 %v1528, 0.01
          %v1657 = vmul.f32 %v1529, 0.01
          %v1658 = vmul.f32 %v1530, 0.01
          %v1659 = vmul.f32 %v1531, 0.01
          %v1660 = vmul.f32 %v1532, 0.01
          %v1661 = vmul.f32 %v1533, 0.01
          %v1662 = vmul.f32 %v1534, 0.01
          %v1663 = vmul.f32 %v1535, 0.01
          %v1664 = vmul.f32 %v1536, 0.01
          %v1665 = vmul.f32 %v1537, 0.01
          %v1666 = vmul.f32 %v1538, 0.01
          %v1667 = vmul.f32 %v1539, 0.01
          %v1668 = vsel %vm1540, %v1476, %v1604
          %v1669 = vsel %vm1541, %v1477, %v1605
          %v1670 = vsel %vm1542, %v1478, %v1606
          %v1671 = vsel %vm1543, %v1479, %v1607
          %v1672 = vsel %vm1544, %v1480, %v1608
          %v1673 = vsel %vm1545, %v1481, %v1609
          %v1674 = vsel %vm1546, %v1482, %v1610
          %v1675 = vsel %vm1547, %v1483, %v1611
          %v1676 = vsel %vm1548, %v1484, %v1612
          %v1677 = vsel %vm1549, %v1485, %v1613
          %v1678 = vsel %vm1550, %v1486, %v1614
          %v1679 = vsel %vm1551, %v1487, %v1615
          %v1680 = vsel %vm1552, %v1488, %v1616
          %v1681 = vsel %vm1553, %v1489, %v1617
          %v1682 = vsel %vm1554, %v1490, %v1618
          %v1683 = vsel %vm1555, %v1491, %v1619
          %v1684 = vsel %vm1556, %v1492, %v1620
          %v1685 = vsel %vm1557, %v1493, %v1621
          %v1686 = vsel %vm1558, %v1494, %v1622
          %v1687 = vsel %vm1559, %v1495, %v1623
          %v1688 = vsel %vm1560, %v1496, %v1624
          %v1689 = vsel %vm1561, %v1497, %v1625
          %v1690 = vsel %vm1562, %v1498, %v1626
          %v1691 = vsel %vm1563, %v1499, %v1627
          %v1692 = vsel %vm1564, %v1500, %v1628
          %v1693 = vsel %vm1565, %v1501, %v1629
          %v1694 = vsel %vm1566, %v1502, %v1630
          %v1695 = vsel %vm1567, %v1503, %v1631
          %v1696 = vsel %vm1568, %v1504, %v1632
          %v1697 = vsel %vm1569, %v1505, %v1633
          %v1698 = vsel %vm1570, %v1506, %v1634
          %v1699 = vsel %vm1571, %v1507, %v1635
          %v1700 = vsel %vm1572, %v1508, %v1636
          %v1701 = vsel %vm1573, %v1509, %v1637
          %v1702 = vsel %vm1574, %v1510, %v1638
          %v1703 = vsel %vm1575, %v1511, %v1639
          %v1704 = vsel %vm1576, %v1512, %v1640
          %v1705 = vsel %vm1577, %v1513, %v1641
          %v1706 = vsel %vm1578, %v1514, %v1642
          %v1707 = vsel %vm1579, %v1515, %v1643
          %v1708 = vsel %vm1580, %v1516, %v1644
          %v1709 = vsel %vm1581, %v1517, %v1645
          %v1710 = vsel %vm1582, %v1518, %v1646
          %v1711 = vsel %vm1583, %v1519, %v1647
          %v1712 = vsel %vm1584, %v1520, %v1648
          %v1713 = vsel %vm1585, %v1521, %v1649
          %v1714 = vsel %vm1586, %v1522, %v1650
          %v1715 = vsel %vm1587, %v1523, %v1651
          %v1716 = vsel %vm1588, %v1524, %v1652
          %v1717 = vsel %vm1589, %v1525, %v1653
          %v1718 = vsel %vm1590, %v1526, %v1654
          %v1719 = vsel %vm1591, %v1527, %v1655
          %v1720 = vsel %vm1592, %v1528, %v1656
          %v1721 = vsel %vm1593, %v1529, %v1657
          %v1722 = vsel %vm1594, %v1530, %v1658
          %v1723 = vsel %vm1595, %v1531, %v1659
          %v1724 = vsel %vm1596, %v1532, %v1660
          %v1725 = vsel %vm1597, %v1533, %v1661
          %v1726 = vsel %vm1598, %v1534, %v1662
          %v1727 = vsel %vm1599, %v1535, %v1663
          %v1728 = vsel %vm1600, %v1536, %v1664
          %v1729 = vsel %vm1601, %v1537, %v1665
          %v1730 = vsel %vm1602, %v1538, %v1666
          %v1731 = vsel %vm1603, %v1539, %v1667
          %1732 = vst [vmem:[%s231] sm:$0xff] %v1668
          %1733 = vst [vmem:[%s231 + $0x8] sm:$0xff] %v1669
          %1734 = vst [vmem:[%s231 + $0x10] sm:$0xff] %v1670
          %1735 = vst [vmem:[%s231 + $0x18] sm:$0xff] %v1671
          %1736 = vst [vmem:[%s231 + $0x20] sm:$0xff] %v1672
          %1737 = vst [vmem:[%s231 + $0x28] sm:$0xff] %v1673
          %1738 = vst [vmem:[%s231 + $0x30] sm:$0xff] %v1674
          %1739 = vst [vmem:[%s231 + $0x38] sm:$0xff] %v1675
          %1740 = vst [vmem:[%s231 + $0x40] sm:$0xff] %v1676
          %1741 = vst [vmem:[%s231 + $0x48] sm:$0xff] %v1677
          %1742 = vst [vmem:[%s231 + $0x50] sm:$0xff] %v1678
          %1743 = vst [vmem:[%s231 + $0x58] sm:$0xff] %v1679
          %1744 = vst [vmem:[%s231 + $0x60] sm:$0xff] %v1680
          %1745 = vst [vmem:[%s231 + $0x68] sm:$0xff] %v1681
          %1746 = vst [vmem:[%s231 + $0x70] sm:$0xff] %v1682
          %1747 = vst [vmem:[%s231 + $0x78] sm:$0xff] %v1683
          %1748 = vst [vmem:[%s231 + $0x80] sm:$0xff] %v1684
          %1749 = vst [vmem:[%s231 + $0x88] sm:$0xff] %v1685
          %1750 = vst [vmem:[%s231 + $0x90] sm:$0xff] %v1686
          %1751 = vst [vmem:[%s231 + $0x98] sm:$0xff] %v1687
          %1752 = vst [vmem:[%s231 + $0xa0] sm:$0xff] %v1688
          %1753 = vst [vmem:[%s231 + $0xa8] sm:$0xff] %v1689
          %1754 = vst [vmem:[%s231 + $0xb0] sm:$0xff] %v1690
          %1755 = vst [vmem:[%s231 + $0xb8] sm:$0xff] %v1691
          %1756 = vst [vmem:[%s231 + $0xc0] sm:$0xff] %v1692
          %1757 = vst [vmem:[%s231 + $0xc8] sm:$0xff] %v1693
          %1758 = vst [vmem:[%s231 + $0xd0] sm:$0xff] %v1694
          %1759 = vst [vmem:[%s231 + $0xd8] sm:$0xff] %v1695
          %1760 = vst [vmem:[%s231 + $0xe0] sm:$0xff] %v1696
          %1761 = vst [vmem:[%s231 + $0xe8] sm:$0xff] %v1697
          %1762 = vst [vmem:[%s231 + $0xf0] sm:$0xff] %v1698
          %1763 = vst [vmem:[%s231 + $0xf8] sm:$0xff] %v1699
          %1764 = vst [vmem:[%s231 + $0x100] sm:$0xff] %v1700
          %1765 = vst [vmem:[%s231 + $0x108] sm:$0xff] %v1701
          %1766 = vst [vmem:[%s231 + $0x110] sm:$0xff] %v1702
          %1767 = vst [vmem:[%s231 + $0x118] sm:$0xff] %v1703
          %1768 = vst [vmem:[%s231 + $0x120] sm:$0xff] %v1704
          %1769 = vst [vmem:[%s231 + $0x128] sm:$0xff] %v1705
          %1770 = vst [vmem:[%s231 + $0x130] sm:$0xff] %v1706
          %1771 = vst [vmem:[%s231 + $0x138] sm:$0xff] %v1707
          %1772 = vst [vmem:[%s231 + $0x140] sm:$0xff] %v1708
          %1773 = vst [vmem:[%s231 + $0x148] sm:$0xff] %v1709
          %1774 = vst [vmem:[%s231 + $0x150] sm:$0xff] %v1710
          %1775 = vst [vmem:[%s231 + $0x158] sm:$0xff] %v1711
          %1776 = vst [vmem:[%s231 + $0x160] sm:$0xff] %v1712
          %1777 = vst [vmem:[%s231 + $0x168] sm:$0xff] %v1713
          %1778 = vst [vmem:[%s231 + $0x170] sm:$0xff] %v1714
          %1779 = vst [vmem:[%s231 + $0x178] sm:$0xff] %v1715
          %1780 = vst [vmem:[%s231 + $0x180] sm:$0xff] %v1716
          %1781 = vst [vmem:[%s231 + $0x188] sm:$0xff] %v1717
          %1782 = vst [vmem:[%s231 + $0x190] sm:$0xff] %v1718
          %1783 = vst [vmem:[%s231 + $0x198] sm:$0xff] %v1719
          %1784 = vst [vmem:[%s231 + $0x1a0] sm:$0xff] %v1720
          %1785 = vst [vmem:[%s231 + $0x1a8] sm:$0xff] %v1721
          %1786 = vst [vmem:[%s231 + $0x1b0] sm:$0xff] %v1722
          %1787 = vst [vmem:[%s231 + $0x1b8] sm:$0xff] %v1723
          %1788 = vst [vmem:[%s231 + $0x1c0] sm:$0xff] %v1724
          %1789 = vst [vmem:[%s231 + $0x1c8] sm:$0xff] %v1725
          %1790 = vst [vmem:[%s231 + $0x1d0] sm:$0xff] %v1726
          %1791 = vst [vmem:[%s231 + $0x1d8] sm:$0xff] %v1727
          %1792 = vst [vmem:[%s231 + $0x1e0] sm:$0xff] %v1728
          %1793 = vst [vmem:[%s231 + $0x1e8] sm:$0xff] %v1729
          %1794 = vst [vmem:[%s231 + $0x1f0] sm:$0xff] %v1730
          %1795 = vst [vmem:[%s231 + $0x1f8] sm:$0xff] %v1731
        $region56: #{convx_forward.1} parent=35 // pred_fallthru
          _
        %s1796 = sand.u32 %s143, 1
        %s1797 = scalar_lea.sflag [#allocation7], %s1796
        %s1798 = sand.u32 %s143, 1
        %s1799 = smul.addr %s1798, 512
        %s1800 = scalar_lea.vmem [#allocation6], %s1799
        // Predicated region
        $region61: #{convx_forward.1} parent=35 // pred_check
          %p1801 = pneg %p153
        $region62: #{convx_forward.1} parent=35 // pred_check_branch
          %1803 = sbr.rel (%p1801) target = $region64
        $region63: #{convx_forward.1} parent=35 // pred_region
          %s1804 = ssub.s32 %s22, 1
          %p1805 = scmp.gt.s32.totalorder %s1804, 0
          %s1806 = scalar_select %p1805, %s1804, 0
          %s1807 = smul.u32 %s23, %s1806
          %s1808 = smul.u32 64, %s1807
          %s1810 = ssub.s32 8192, 8192
          %1811 = vsyncadd %s1797, %s1810
          %s1812 = smul.addr %s1808, 128
          %s1813 = scalar_lea.hbm %s4, %s1812
          %s1814 = sshll.u32 %s1800, 4
          %s1815 = int_to_ptr.vmem [resolvable:$true] %s1814
          %1820 = dma.vmem_to_hbm [thread:$0]  %s1815, 8192, %s1813, %s1797, 128, 128, 8
        $region64: #{convx_forward.1} parent=35 // pred_fallthru
          _
      $region36: #{convx_forward.1} parent=5 // pred_fallthru
        _
      %p1821 = scmp.le.s32.totalorder 2, %s13
      // Predicated region
      $region65: #{convx_forward.1} parent=5 // pred_check
        %p1822 = pneg %p1821
      $region66: #{convx_forward.1} parent=5 // pred_check_branch
        %1824 = sbr.rel (%p1822) target = $region68
      $region67: #{convx_forward.1} parent=5 // pred_region
        %s1825 = ssub.s32 %s13, 2
        // Predicated region
        $region69: #{convx_forward.1} parent=67 // pred_check
          %p1826 = pneg %p159
        $region70: #{convx_forward.1} parent=67 // pred_check_branch
          %1828 = sbr.rel (%p1826) target = $region72
        $region71: #{convx_forward.1} parent=67 // pred_region
          %s1829 = sand.u32 %s144, 1
          %s1830 = scalar_lea.sflag [#allocation7], %s1829
          %s1831 = sand.u32 %s144, 1
          %s1832 = smul.addr %s1831, 512
          %s1833 = scalar_lea.vmem [#allocation6], %s1832
          %1834 = dma.done %s1830, 8192
        $region72: #{convx_forward.1} parent=67 // pred_fallthru
          _
      $region68: #{convx_forward.1} parent=5 // pred_fallthru
        _
    $region6: #{convx_forward.1} parent=1 // loop_footer
      %s17 = sadd.s32 1, %s13
    $region7: #{convx_forward.1} parent=1 // loop_footer_branch
      %12 = sbr.rel target = $region3
    $region8: #{convx_forward.1} parent=1 // loop_exit
      _
    %1835 = vsyncpa [#allocation7], 1
    %s1836 = scalar_lea.sflag [#allocation7], 1
    %1837 = vsyncpa %s1836, 1

</llo_original>
